<compile_context>
chip_gen: v5e
topology: v5e:2x2
jax: 0.10.0
libtpu: 0.0.40
codegen_flags: <defaults>
</compile_context>

<pallas_src>
import functools

import jax
import jax.numpy as jnp
from jax.experimental import pallas as pl
from jax.experimental.pallas import tpu as pltpu


def _space_to_depth_kernel(x_ref, sel_ref, o_ref, *, block_size, width, wd, ht,
                           acc_dtype):
    """One (batch, channel-group, deep-row-group) tile.

    x_ref  : (Cb, Ht*bs*W)    sublanes: channel c; lanes ordered (i_local, hb, w)
    sel_ref: (bs, W, Wd)      one-hot gather matrices, sel[wb, w, j] = (w == j*bs+wb)
    o_ref  : (bs*bs, Cb, Ht*Wd)  sublanes: channel c; lanes ordered (i_local, j)
    """
    bs, W, Wd, Ht = block_size, width, wd, ht

    for wb in range(bs):
        sel = sel_ref[wb]                       # (W, Wd); RHS constant over hb & i
        for hb in range(bs):
            for i in range(Ht):                 # static unroll; Ht kept modest by the tiler
                # Contiguous (static) lane slice of the input: original image row
                # i*bs + hb of every channel in this group.
                rows = x_ref[:, (i * bs + hb) * W:(i * bs + hb + 1) * W]      # (Cb, W)
                # One-hot MXU gather of the stride-bs columns -> (Cb, Wd); stored
                # whole (no intermediate slab, no unaligned value slicing).
                piece = jnp.dot(rows, sel, preferred_element_type=acc_dtype)
                o_ref[hb * bs + wb, :, i * Wd:(i + 1) * Wd] = piece.astype(o_ref.dtype)


def _dtype_packing(dtype):
    """Sublane packing for the second-minor block dim (8 f32 / 16 bf16 / 32 int8)."""
    return {4: 8, 2: 16, 1: 32}.get(jnp.dtype(dtype).itemsize, 8)


def _vmem_capacity_bytes():
    try:
        return int(pltpu.get_tpu_info().vmem_capacity_bytes)
    except Exception:
        return 64 << 20          # v7x per-TensorCore capacity == the safe lower bound


def _choose_tiles(C, Hd, Wd, bs, W, itemsize, sel_bytes, budget_bytes, pack):
    """Pick (Cb, Ht).

    Legality (BlockSpec last-two-dims rule):
      Cb == C   or  Cb % pack == 0          (second-minor dim of both blocks)
      Ht == Hd  or  (Ht*Wd) % 128 == 0      (lane dim of the output block; the input
                                             block lane dim bs*bs*(Ht*Wd) follows)
    Among legal pairs whose double-buffered in+out blocks (+ sel) fit the budget,
    pick the largest block; ties prefer larger Cb (bigger matmul M, smaller unroll).
    """
    cb_cands = [d for d in range(1, C + 1)
                if C % d == 0 and (d == C or d % pack == 0)]
    ht_cands = [d for d in range(1, Hd + 1)
                if Hd % d == 0 and (d == Hd or (d * Wd) % 128 == 0)]
    ht_small = min(ht_cands)
    # Keep the static unroll (bs*bs*Ht matmuls per grid step) bounded.
    ht_cands = [h for h in ht_cands if bs * bs * h <= 256] or [ht_small]

    def residency(cb, ht):
        block_bytes = cb * ht * bs * W * itemsize      # input block == output block bytes
        return 4 * block_bytes + 2 * sel_bytes         # double-buffered in + out, + sel

    fitting = [(cb * ht, cb, ht) for cb in cb_cands for ht in ht_cands
               if residency(cb, ht) <= budget_bytes]
    if fitting:
        _, cb, ht = max(fitting)
    else:                                              # smallest legal tile; still correct
        cb, ht = min(cb_cands), ht_small
    return cb, ht


def space_to_depth(x, block_size):
    B, C, H, W = x.shape
    bs = block_size
    if H % bs or W % bs:
        raise ValueError("spatial dims must be divisible by block_size")
    if not jnp.issubdtype(x.dtype, jnp.floating):
        # TODO(synk): integer dtypes need a non-MXU gather path (see header comment).
        raise NotImplementedError("floating-point inputs only")

    Hd, Wd = H // bs, W // bs
    dtype = x.dtype
    itemsize = jnp.dtype(dtype).itemsize
    # bf16 pops bf16 directly (exact for a one-hot gather); f32 stays f32; the
    # per-store astype below is then a no-op.
    acc_dtype = dtype

    pack = _dtype_packing(dtype)
    sel_bytes = bs * W * Wd * itemsize
    capacity = _vmem_capacity_bytes()
    budget = (capacity * 55) // 100            # ~half of physical VMEM for the working set
    Cb, Ht = _choose_tiles(C, Hd, Wd, bs, W, itemsize, sel_bytes, budget, pack)
    G, T = C // Cb, Hd // Ht
    # Note: with B >= 2 (or G*T >= 2) both v7x TensorCores get grid steps.

    block_bytes = Cb * Ht * bs * W * itemsize
    residency = 4 * block_bytes + 2 * sel_bytes
    vmem_limit = int(min((capacity * 9) // 10, max(residency + (8 << 20), 32 << 20)))

    # Free reshape: x3[b, c, (i*bs+hb)*W + w] = x[b, c, i*bs+hb, w].
    x3 = x.reshape(B, C, H * W)

    # One-hot lane-gather matrices: sel[wb, w, j] = (w == j*bs + wb).
    w_idx = jnp.arange(W)[None, :, None]
    tgt = jnp.arange(Wd)[None, None, :] * bs + jnp.arange(bs)[:, None, None]
    sel = (w_idx == tgt).astype(acc_dtype)                       # (bs, W, Wd)

    kernel = functools.partial(_space_to_depth_kernel, block_size=bs, width=W,
                               wd=Wd, ht=Ht, acc_dtype=acc_dtype)

    cost = pl.CostEstimate(
        flops=2 * B * C * H * W * W,                             # 2*W per output element
        transcendentals=0,
        bytes_accessed=2 * B * C * H * W * itemsize + sel_bytes)

    out4 = pl.pallas_call(
        kernel,
        out_shape=jax.ShapeDtypeStruct((B, bs * bs, C, Hd * Wd), dtype),
        grid=(B, G, T),
        in_specs=[
            # (Cb, Ht*bs*W) channel/deep-row slab per grid step (batch squeezed)
            pl.BlockSpec((None, Cb, Ht * bs * W), lambda b, g, t: (b, g, t)),
            # tiny constant selection matrices (block index never changes)
            pl.BlockSpec((bs, W, Wd), lambda b, g, t: (0, 0, 0)),
        ],
        # lane-dense output block: last dim Ht*Wd (full or a multiple of 128)
        out_specs=pl.BlockSpec((None, bs * bs, Cb, Ht * Wd),
                               lambda b, g, t: (b, 0, g, t)),
        compiler_params=pltpu.CompilerParams(
            dimension_semantics=("parallel", "parallel", "parallel"),
            vmem_limit_bytes=vmem_limit),
        cost_estimate=cost,
    )(x3, sel)

    # Free reshape: (b, hb*bs+wb, c, i*Wd+j) -> (b, (hb*bs+wb)*C + c, i, j).
    return out4.reshape(B, bs * bs * C, Hd, Wd)


if __name__ == "__main__":
    key = jax.random.PRNGKey(0)
    B, C, H, W = 2, 4, 16, 16
    block_size = 2

    x = jax.random.normal(key, (B, C, H, W), dtype=jnp.float32)

    out = jax.block_until_ready(space_to_depth(x, block_size))

    # Pure-JAX reference with identical semantics to the PyTorch module:
    # out[b, (hb*bs + wb)*C + c, i, j] = x[b, c, i*bs + hb, j*bs + wb]
    Hd, Wd = H // block_size, W // block_size
    ref = x.reshape(B, C, Hd, block_size, Wd, block_size)
    ref = ref.transpose(0, 3, 5, 1, 2, 4).reshape(
        B, block_size * block_size * C, Hd, Wd
    )

    assert out.shape == ref.shape
    assert out.dtype == x.dtype
    assert jnp.array_equal(out, ref), "Pallas SpaceToDepth mismatch vs reference"
    print("KERNEL_OK")
</pallas_src>

<mosaic_0001>
module attributes {stable_mosaic.version = 11 : i64} {
  func.func @_space_to_depth_kernel(%arg0: i32, %arg1: i32, %arg2: i32, %arg3: memref<1x4x256xf32, #tpu.memory_space<vmem>>, %arg4: memref<2x16x8xf32, #tpu.memory_space<vmem>>, %arg5: memref<1x4x4x64xf32, #tpu.memory_space<vmem>>) attributes {dimension_semantics = [#tpu.dimension_semantics<parallel>, #tpu.dimension_semantics<parallel>, #tpu.dimension_semantics<parallel>], iteration_bounds = array<i64: 2, 1, 1>, scalar_prefetch = 0 : i64, scratch_operands = 0 : i64, tpu.core_type = #tpu.core_type<tc>, window_params = [{transform_indices = @transform_0, window_bounds = array<i64: 1, 4, 256>}, {pipeline_mode = #tpu.pipeline_mode<synchronous>, transform_indices = @transform_1, window_bounds = array<i64: 2, 16, 8>}, {transform_indices = @transform_2, window_bounds = array<i64: 1, 4, 4, 64>}]} {
    %c0 = arith.constant 0 : index
    %c0_0 = arith.constant 0 : index
    %c0_1 = arith.constant 0 : index
    %0 = vector.load %arg4[%c0, %c0_0, %c0_1] : memref<2x16x8xf32, #tpu.memory_space<vmem>>, vector<1x16x8xf32>
    %1 = vector.shape_cast %0 : vector<1x16x8xf32> to vector<16x8xf32>
    %c0_2 = arith.constant 0 : index
    %c0_3 = arith.constant 0 : index
    %c0_4 = arith.constant 0 : index
    %2 = vector.load %arg3[%c0_2, %c0_3, %c0_4] : memref<1x4x256xf32, #tpu.memory_space<vmem>>, vector<1x4x16xf32>
    %3 = vector.shape_cast %2 : vector<1x4x16xf32> to vector<4x16xf32>
    %cst = arith.constant dense<0.000000e+00> : vector<4x8xf32>
    %4 = tpu.matmul %3, %1, %cst {dimension_numbers = #tpu.dot_dimension_numbers<[1], [0], [0], [1], [0, 0, 1, 1], [], []>} : vector<4x16xf32>, vector<16x8xf32>, vector<4x8xf32> -> vector<4x8xf32>
    %c0_5 = arith.constant 0 : index
    %c0_6 = arith.constant 0 : index
    %c0_7 = arith.constant 0 : index
    %c0_8 = arith.constant 0 : index
    %5 = vector.load %arg5[%c0_5, %c0_6, %c0_7, %c0_8] : memref<1x4x4x64xf32, #tpu.memory_space<vmem>>, vector<1x1x4x8xf32>
    %6 = vector.shape_cast %5 : vector<1x1x4x8xf32> to vector<4x8xf32>
    %7 = vector.shape_cast %4 : vector<4x8xf32> to vector<1x1x4x8xf32>
    tpu.vector_store %arg5[%c0_5, %c0_6, %c0_7, %c0_8], %7 {strides = array<i32>} : memref<1x4x4x64xf32, #tpu.memory_space<vmem>>, vector<1x1x4x8xf32>,
    %c0_9 = arith.constant 0 : index
    %c0_10 = arith.constant 0 : index
    %c32 = arith.constant 32 : index
    %8 = vector.load %arg3[%c0_9, %c0_10, %c32] : memref<1x4x256xf32, #tpu.memory_space<vmem>>, vector<1x4x16xf32>
    %9 = vector.shape_cast %8 : vector<1x4x16xf32> to vector<4x16xf32>
    %cst_11 = arith.constant dense<0.000000e+00> : vector<4x8xf32>
    %10 = tpu.matmul %9, %1, %cst_11 {dimension_numbers = #tpu.dot_dimension_numbers<[1], [0], [0], [1], [0, 0, 1, 1], [], []>} : vector<4x16xf32>, vector<16x8xf32>, vector<4x8xf32> -> vector<4x8xf32>
    %c0_12 = arith.constant 0 : index
    %c0_13 = arith.constant 0 : index
    %c0_14 = arith.constant 0 : index
    %c8 = arith.constant 8 : index
    %11 = vector.load %arg5[%c0_12, %c0_13, %c0_14, %c8] : memref<1x4x4x64xf32, #tpu.memory_space<vmem>>, vector<1x1x4x8xf32>
    %12 = vector.shape_cast %11 : vector<1x1x4x8xf32> to vector<4x8xf32>
    %13 = vector.shape_cast %10 : vector<4x8xf32> to vector<1x1x4x8xf32>
    tpu.vector_store %arg5[%c0_12, %c0_13, %c0_14, %c8], %13 {strides = array<i32>} : memref<1x4x4x64xf32, #tpu.memory_space<vmem>>, vector<1x1x4x8xf32>,
    %c0_15 = arith.constant 0 : index
    %c0_16 = arith.constant 0 : index
    %c64 = arith.constant 64 : index
    %14 = vector.load %arg3[%c0_15, %c0_16, %c64] : memref<1x4x256xf32, #tpu.memory_space<vmem>>, vector<1x4x16xf32>
    %15 = vector.shape_cast %14 : vector<1x4x16xf32> to vector<4x16xf32>
    %cst_17 = arith.constant dense<0.000000e+00> : vector<4x8xf32>
    %16 = tpu.matmul %15, %1, %cst_17 {dimension_numbers = #tpu.dot_dimension_numbers<[1], [0], [0], [1], [0, 0, 1, 1], [], []>} : vector<4x16xf32>, vector<16x8xf32>, vector<4x8xf32> -> vector<4x8xf32>
    %c0_18 = arith.constant 0 : index
    %c0_19 = arith.constant 0 : index
    %c0_20 = arith.constant 0 : index
    %c16 = arith.constant 16 : index
    %17 = vector.load %arg5[%c0_18, %c0_19, %c0_20, %c16] : memref<1x4x4x64xf32, #tpu.memory_space<vmem>>, vector<1x1x4x8xf32>
    %18 = vector.shape_cast %17 : vector<1x1x4x8xf32> to vector<4x8xf32>
    %19 = vector.shape_cast %16 : vector<4x8xf32> to vector<1x1x4x8xf32>
    tpu.vector_store %arg5[%c0_18, %c0_19, %c0_20, %c16], %19 {strides = array<i32>} : memref<1x4x4x64xf32, #tpu.memory_space<vmem>>, vector<1x1x4x8xf32>,
    %c0_21 = arith.constant 0 : index
    %c0_22 = arith.constant 0 : index
    %c96 = arith.constant 96 : index
    %20 = vector.load %arg3[%c0_21, %c0_22, %c96] : memref<1x4x256xf32, #tpu.memory_space<vmem>>, vector<1x4x16xf32>
    %21 = vector.shape_cast %20 : vector<1x4x16xf32> to vector<4x16xf32>
    %cst_23 = arith.constant dense<0.000000e+00> : vector<4x8xf32>
    %22 = tpu.matmul %21, %1, %cst_23 {dimension_numbers = #tpu.dot_dimension_numbers<[1], [0], [0], [1], [0, 0, 1, 1], [], []>} : vector<4x16xf32>, vector<16x8xf32>, vector<4x8xf32> -> vector<4x8xf32>
    %c0_24 = arith.constant 0 : index
    %c0_25 = arith.constant 0 : index
    %c0_26 = arith.constant 0 : index
    %c24 = arith.constant 24 : index
    %23 = vector.load %arg5[%c0_24, %c0_25, %c0_26, %c24] : memref<1x4x4x64xf32, #tpu.memory_space<vmem>>, vector<1x1x4x8xf32>
    %24 = vector.shape_cast %23 : vector<1x1x4x8xf32> to vector<4x8xf32>
    %25 = vector.shape_cast %22 : vector<4x8xf32> to vector<1x1x4x8xf32>
    tpu.vector_store %arg5[%c0_24, %c0_25, %c0_26, %c24], %25 {strides = array<i32>} : memref<1x4x4x64xf32, #tpu.memory_space<vmem>>, vector<1x1x4x8xf32>,
    %c0_27 = arith.constant 0 : index
    %c0_28 = arith.constant 0 : index
    %c128 = arith.constant 128 : index
    %26 = vector.load %arg3[%c0_27, %c0_28, %c128] : memref<1x4x256xf32, #tpu.memory_space<vmem>>, vector<1x4x16xf32>
    %27 = vector.shape_cast %26 : vector<1x4x16xf32> to vector<4x16xf32>
    %cst_29 = arith.constant dense<0.000000e+00> : vector<4x8xf32>
    %28 = tpu.matmul %27, %1, %cst_29 {dimension_numbers = #tpu.dot_dimension_numbers<[1], [0], [0], [1], [0, 0, 1, 1], [], []>} : vector<4x16xf32>, vector<16x8xf32>, vector<4x8xf32> -> vector<4x8xf32>
    %c0_30 = arith.constant 0 : index
    %c0_31 = arith.constant 0 : index
    %c0_32 = arith.constant 0 : index
    %c32_33 = arith.constant 32 : index
    %29 = vector.load %arg5[%c0_30, %c0_31, %c0_32, %c32_33] : memref<1x4x4x64xf32, #tpu.memory_space<vmem>>, vector<1x1x4x8xf32>
    %30 = vector.shape_cast %29 : vector<1x1x4x8xf32> to vector<4x8xf32>
    %31 = vector.shape_cast %28 : vector<4x8xf32> to vector<1x1x4x8xf32>
    tpu.vector_store %arg5[%c0_30, %c0_31, %c0_32, %c32_33], %31 {strides = array<i32>} : memref<1x4x4x64xf32, #tpu.memory_space<vmem>>, vector<1x1x4x8xf32>,
    %c0_34 = arith.constant 0 : index
    %c0_35 = arith.constant 0 : index
    %c160 = arith.constant 160 : index
    %32 = vector.load %arg3[%c0_34, %c0_35, %c160] : memref<1x4x256xf32, #tpu.memory_space<vmem>>, vector<1x4x16xf32>
    %33 = vector.shape_cast %32 : vector<1x4x16xf32> to vector<4x16xf32>
    %cst_36 = arith.constant dense<0.000000e+00> : vector<4x8xf32>
    %34 = tpu.matmul %33, %1, %cst_36 {dimension_numbers = #tpu.dot_dimension_numbers<[1], [0], [0], [1], [0, 0, 1, 1], [], []>} : vector<4x16xf32>, vector<16x8xf32>, vector<4x8xf32> -> vector<4x8xf32>
    %c0_37 = arith.constant 0 : index
    %c0_38 = arith.constant 0 : index
    %c0_39 = arith.constant 0 : index
    %c40 = arith.constant 40 : index
    %35 = vector.load %arg5[%c0_37, %c0_38, %c0_39, %c40] : memref<1x4x4x64xf32, #tpu.memory_space<vmem>>, vector<1x1x4x8xf32>
    %36 = vector.shape_cast %35 : vector<1x1x4x8xf32> to vector<4x8xf32>
    %37 = vector.shape_cast %34 : vector<4x8xf32> to vector<1x1x4x8xf32>
    tpu.vector_store %arg5[%c0_37, %c0_38, %c0_39, %c40], %37 {strides = array<i32>} : memref<1x4x4x64xf32, #tpu.memory_space<vmem>>, vector<1x1x4x8xf32>,
    %c0_40 = arith.constant 0 : index
    %c0_41 = arith.constant 0 : index
    %c192 = arith.constant 192 : index
    %38 = vector.load %arg3[%c0_40, %c0_41, %c192] : memref<1x4x256xf32, #tpu.memory_space<vmem>>, vector<1x4x16xf32>
    %39 = vector.shape_cast %38 : vector<1x4x16xf32> to vector<4x16xf32>
    %cst_42 = arith.constant dense<0.000000e+00> : vector<4x8xf32>
    %40 = tpu.matmul %39, %1, %cst_42 {dimension_numbers = #tpu.dot_dimension_numbers<[1], [0], [0], [1], [0, 0, 1, 1], [], []>} : vector<4x16xf32>, vector<16x8xf32>, vector<4x8xf32> -> vector<4x8xf32>
    %c0_43 = arith.constant 0 : index
    %c0_44 = arith.constant 0 : index
    %c0_45 = arith.constant 0 : index
    %c48 = arith.constant 48 : index
    %41 = vector.load %arg5[%c0_43, %c0_44, %c0_45, %c48] : memref<1x4x4x64xf32, #tpu.memory_space<vmem>>, vector<1x1x4x8xf32>
    %42 = vector.shape_cast %41 : vector<1x1x4x8xf32> to vector<4x8xf32>
    %43 = vector.shape_cast %40 : vector<4x8xf32> to vector<1x1x4x8xf32>
    tpu.vector_store %arg5[%c0_43, %c0_44, %c0_45, %c48], %43 {strides = array<i32>} : memref<1x4x4x64xf32, #tpu.memory_space<vmem>>, vector<1x1x4x8xf32>,
    %c0_46 = arith.constant 0 : index
    %c0_47 = arith.constant 0 : index
    %c224 = arith.constant 224 : index
    %44 = vector.load %arg3[%c0_46, %c0_47, %c224] : memref<1x4x256xf32, #tpu.memory_space<vmem>>, vector<1x4x16xf32>
    %45 = vector.shape_cast %44 : vector<1x4x16xf32> to vector<4x16xf32>
    %cst_48 = arith.constant dense<0.000000e+00> : vector<4x8xf32>
    %46 = tpu.matmul %45, %1, %cst_48 {dimension_numbers = #tpu.dot_dimension_numbers<[1], [0], [0], [1], [0, 0, 1, 1], [], []>} : vector<4x16xf32>, vector<16x8xf32>, vector<4x8xf32> -> vector<4x8xf32>
    %c0_49 = arith.constant 0 : index
    %c0_50 = arith.constant 0 : index
    %c0_51 = arith.constant 0 : index
    %c56 = arith.constant 56 : index
    %47 = vector.load %arg5[%c0_49, %c0_50, %c0_51, %c56] : memref<1x4x4x64xf32, #tpu.memory_space<vmem>>, vector<1x1x4x8xf32>
    %48 = vector.shape_cast %47 : vector<1x1x4x8xf32> to vector<4x8xf32>
    %49 = vector.shape_cast %46 : vector<4x8xf32> to vector<1x1x4x8xf32>
    tpu.vector_store %arg5[%c0_49, %c0_50, %c0_51, %c56], %49 {strides = array<i32>} : memref<1x4x4x64xf32, #tpu.memory_space<vmem>>, vector<1x1x4x8xf32>,
    %c0_52 = arith.constant 0 : index
    %c0_53 = arith.constant 0 : index
    %c16_54 = arith.constant 16 : index
    %50 = vector.load %arg3[%c0_52, %c0_53, %c16_54] : memref<1x4x256xf32, #tpu.memory_space<vmem>>, vector<1x4x16xf32>
    %51 = vector.shape_cast %50 : vector<1x4x16xf32> to vector<4x16xf32>
    %cst_55 = arith.constant dense<0.000000e+00> : vector<4x8xf32>
    %52 = tpu.matmul %51, %1, %cst_55 {dimension_numbers = #tpu.dot_dimension_numbers<[1], [0], [0], [1], [0, 0, 1, 1], [], []>} : vector<4x16xf32>, vector<16x8xf32>, vector<4x8xf32> -> vector<4x8xf32>
    %c0_56 = arith.constant 0 : index
    %c2 = arith.constant 2 : index
    %c0_57 = arith.constant 0 : index
    %c0_58 = arith.constant 0 : index
    %53 = vector.load %arg5[%c0_56, %c2, %c0_57, %c0_58] : memref<1x4x4x64xf32, #tpu.memory_space<vmem>>, vector<1x1x4x8xf32>
    %54 = vector.shape_cast %53 : vector<1x1x4x8xf32> to vector<4x8xf32>
    %55 = vector.shape_cast %52 : vector<4x8xf32> to vector<1x1x4x8xf32>
    tpu.vector_store %arg5[%c0_56, %c2, %c0_57, %c0_58], %55 {strides = array<i32>} : memref<1x4x4x64xf32, #tpu.memory_space<vmem>>, vector<1x1x4x8xf32>,
    %c0_59 = arith.constant 0 : index
    %c0_60 = arith.constant 0 : index
    %c48_61 = arith.constant 48 : index
    %56 = vector.load %arg3[%c0_59, %c0_60, %c48_61] : memref<1x4x256xf32, #tpu.memory_space<vmem>>, vector<1x4x16xf32>
    %57 = vector.shape_cast %56 : vector<1x4x16xf32> to vector<4x16xf32>
    %cst_62 = arith.constant dense<0.000000e+00> : vector<4x8xf32>
    %58 = tpu.matmul %57, %1, %cst_62 {dimension_numbers = #tpu.dot_dimension_numbers<[1], [0], [0], [1], [0, 0, 1, 1], [], []>} : vector<4x16xf32>, vector<16x8xf32>, vector<4x8xf32> -> vector<4x8xf32>
    %c0_63 = arith.constant 0 : index
    %c2_64 = arith.constant 2 : index
    %c0_65 = arith.constant 0 : index
    %c8_66 = arith.constant 8 : index
    %59 = vector.load %arg5[%c0_63, %c2_64, %c0_65, %c8_66] : memref<1x4x4x64xf32, #tpu.memory_space<vmem>>, vector<1x1x4x8xf32>
    %60 = vector.shape_cast %59 : vector<1x1x4x8xf32> to vector<4x8xf32>
    %61 = vector.shape_cast %58 : vector<4x8xf32> to vector<1x1x4x8xf32>
    tpu.vector_store %arg5[%c0_63, %c2_64, %c0_65, %c8_66], %61 {strides = array<i32>} : memref<1x4x4x64xf32, #tpu.memory_space<vmem>>, vector<1x1x4x8xf32>,
    %c0_67 = arith.constant 0 : index
    %c0_68 = arith.constant 0 : index
    %c80 = arith.constant 80 : index
    %62 = vector.load %arg3[%c0_67, %c0_68, %c80] : memref<1x4x256xf32, #tpu.memory_space<vmem>>, vector<1x4x16xf32>
    %63 = vector.shape_cast %62 : vector<1x4x16xf32> to vector<4x16xf32>
    %cst_69 = arith.constant dense<0.000000e+00> : vector<4x8xf32>
    %64 = tpu.matmul %63, %1, %cst_69 {dimension_numbers = #tpu.dot_dimension_numbers<[1], [0], [0], [1], [0, 0, 1, 1], [], []>} : vector<4x16xf32>, vector<16x8xf32>, vector<4x8xf32> -> vector<4x8xf32>
    %c0_70 = arith.constant 0 : index
    %c2_71 = arith.constant 2 : index
    %c0_72 = arith.constant 0 : index
    %c16_73 = arith.constant 16 : index
    %65 = vector.load %arg5[%c0_70, %c2_71, %c0_72, %c16_73] : memref<1x4x4x64xf32, #tpu.memory_space<vmem>>, vector<1x1x4x8xf32>
    %66 = vector.shape_cast %65 : vector<1x1x4x8xf32> to vector<4x8xf32>
    %67 = vector.shape_cast %64 : vector<4x8xf32> to vector<1x1x4x8xf32>
    tpu.vector_store %arg5[%c0_70, %c2_71, %c0_72, %c16_73], %67 {strides = array<i32>} : memref<1x4x4x64xf32, #tpu.memory_space<vmem>>, vector<1x1x4x8xf32>,
    %c0_74 = arith.constant 0 : index
    %c0_75 = arith.constant 0 : index
    %c112 = arith.constant 112 : index
    %68 = vector.load %arg3[%c0_74, %c0_75, %c112] : memref<1x4x256xf32, #tpu.memory_space<vmem>>, vector<1x4x16xf32>
    %69 = vector.shape_cast %68 : vector<1x4x16xf32> to vector<4x16xf32>
    %cst_76 = arith.constant dense<0.000000e+00> : vector<4x8xf32>
    %70 = tpu.matmul %69, %1, %cst_76 {dimension_numbers = #tpu.dot_dimension_numbers<[1], [0], [0], [1], [0, 0, 1, 1], [], []>} : vector<4x16xf32>, vector<16x8xf32>, vector<4x8xf32> -> vector<4x8xf32>
    %c0_77 = arith.constant 0 : index
    %c2_78 = arith.constant 2 : index
    %c0_79 = arith.constant 0 : index
    %c24_80 = arith.constant 24 : index
    %71 = vector.load %arg5[%c0_77, %c2_78, %c0_79, %c24_80] : memref<1x4x4x64xf32, #tpu.memory_space<vmem>>, vector<1x1x4x8xf32>
    %72 = vector.shape_cast %71 : vector<1x1x4x8xf32> to vector<4x8xf32>
    %73 = vector.shape_cast %70 : vector<4x8xf32> to vector<1x1x4x8xf32>
    tpu.vector_store %arg5[%c0_77, %c2_78, %c0_79, %c24_80], %73 {strides = array<i32>} : memref<1x4x4x64xf32, #tpu.memory_space<vmem>>, vector<1x1x4x8xf32>,
    %c0_81 = arith.constant 0 : index
    %c0_82 = arith.constant 0 : index
    %c144 = arith.constant 144 : index
    %74 = vector.load %arg3[%c0_81, %c0_82, %c144] : memref<1x4x256xf32, #tpu.memory_space<vmem>>, vector<1x4x16xf32>
    %75 = vector.shape_cast %74 : vector<1x4x16xf32> to vector<4x16xf32>
    %cst_83 = arith.constant dense<0.000000e+00> : vector<4x8xf32>
    %76 = tpu.matmul %75, %1, %cst_83 {dimension_numbers = #tpu.dot_dimension_numbers<[1], [0], [0], [1], [0, 0, 1, 1], [], []>} : vector<4x16xf32>, vector<16x8xf32>, vector<4x8xf32> -> vector<4x8xf32>
    %c0_84 = arith.constant 0 : index
    %c2_85 = arith.constant 2 : index
    %c0_86 = arith.constant 0 : index
    %c32_87 = arith.constant 32 : index
    %77 = vector.load %arg5[%c0_84, %c2_85, %c0_86, %c32_87] : memref<1x4x4x64xf32, #tpu.memory_space<vmem>>, vector<1x1x4x8xf32>
    %78 = vector.shape_cast %77 : vector<1x1x4x8xf32> to vector<4x8xf32>
    %79 = vector.shape_cast %76 : vector<4x8xf32> to vector<1x1x4x8xf32>
    tpu.vector_store %arg5[%c0_84, %c2_85, %c0_86, %c32_87], %79 {strides = array<i32>} : memref<1x4x4x64xf32, #tpu.memory_space<vmem>>, vector<1x1x4x8xf32>,
    %c0_88 = arith.constant 0 : index
    %c0_89 = arith.constant 0 : index
    %c176 = arith.constant 176 : index
    %80 = vector.load %arg3[%c0_88, %c0_89, %c176] : memref<1x4x256xf32, #tpu.memory_space<vmem>>, vector<1x4x16xf32>
    %81 = vector.shape_cast %80 : vector<1x4x16xf32> to vector<4x16xf32>
    %cst_90 = arith.constant dense<0.000000e+00> : vector<4x8xf32>
    %82 = tpu.matmul %81, %1, %cst_90 {dimension_numbers = #tpu.dot_dimension_numbers<[1], [0], [0], [1], [0, 0, 1, 1], [], []>} : vector<4x16xf32>, vector<16x8xf32>, vector<4x8xf32> -> vector<4x8xf32>
    %c0_91 = arith.constant 0 : index
    %c2_92 = arith.constant 2 : index
    %c0_93 = arith.constant 0 : index
    %c40_94 = arith.constant 40 : index
    %83 = vector.load %arg5[%c0_91, %c2_92, %c0_93, %c40_94] : memref<1x4x4x64xf32, #tpu.memory_space<vmem>>, vector<1x1x4x8xf32>
    %84 = vector.shape_cast %83 : vector<1x1x4x8xf32> to vector<4x8xf32>
    %85 = vector.shape_cast %82 : vector<4x8xf32> to vector<1x1x4x8xf32>
    tpu.vector_store %arg5[%c0_91, %c2_92, %c0_93, %c40_94], %85 {strides = array<i32>} : memref<1x4x4x64xf32, #tpu.memory_space<vmem>>, vector<1x1x4x8xf32>,
    %c0_95 = arith.constant 0 : index
    %c0_96 = arith.constant 0 : index
    %c208 = arith.constant 208 : index
    %86 = vector.load %arg3[%c0_95, %c0_96, %c208] : memref<1x4x256xf32, #tpu.memory_space<vmem>>, vector<1x4x16xf32>
    %87 = vector.shape_cast %86 : vector<1x4x16xf32> to vector<4x16xf32>
    %cst_97 = arith.constant dense<0.000000e+00> : vector<4x8xf32>
    %88 = tpu.matmul %87, %1, %cst_97 {dimension_numbers = #tpu.dot_dimension_numbers<[1], [0], [0], [1], [0, 0, 1, 1], [], []>} : vector<4x16xf32>, vector<16x8xf32>, vector<4x8xf32> -> vector<4x8xf32>
    %c0_98 = arith.constant 0 : index
    %c2_99 = arith.constant 2 : index
    %c0_100 = arith.constant 0 : index
    %c48_101 = arith.constant 48 : index
    %89 = vector.load %arg5[%c0_98, %c2_99, %c0_100, %c48_101] : memref<1x4x4x64xf32, #tpu.memory_space<vmem>>, vector<1x1x4x8xf32>
    %90 = vector.shape_cast %89 : vector<1x1x4x8xf32> to vector<4x8xf32>
    %91 = vector.shape_cast %88 : vector<4x8xf32> to vector<1x1x4x8xf32>
    tpu.vector_store %arg5[%c0_98, %c2_99, %c0_100, %c48_101], %91 {strides = array<i32>} : memref<1x4x4x64xf32, #tpu.memory_space<vmem>>, vector<1x1x4x8xf32>,
    %c0_102 = arith.constant 0 : index
    %c0_103 = arith.constant 0 : index
    %c240 = arith.constant 240 : index
    %92 = vector.load %arg3[%c0_102, %c0_103, %c240] : memref<1x4x256xf32, #tpu.memory_space<vmem>>, vector<1x4x16xf32>
    %93 = vector.shape_cast %92 : vector<1x4x16xf32> to vector<4x16xf32>
    %cst_104 = arith.constant dense<0.000000e+00> : vector<4x8xf32>
    %94 = tpu.matmul %93, %1, %cst_104 {dimension_numbers = #tpu.dot_dimension_numbers<[1], [0], [0], [1], [0, 0, 1, 1], [], []>} : vector<4x16xf32>, vector<16x8xf32>, vector<4x8xf32> -> vector<4x8xf32>
    %c0_105 = arith.constant 0 : index
    %c2_106 = arith.constant 2 : index
    %c0_107 = arith.constant 0 : index
    %c56_108 = arith.constant 56 : index
    %95 = vector.load %arg5[%c0_105, %c2_106, %c0_107, %c56_108] : memref<1x4x4x64xf32, #tpu.memory_space<vmem>>, vector<1x1x4x8xf32>
    %96 = vector.shape_cast %95 : vector<1x1x4x8xf32> to vector<4x8xf32>
    %97 = vector.shape_cast %94 : vector<4x8xf32> to vector<1x1x4x8xf32>
    tpu.vector_store %arg5[%c0_105, %c2_106, %c0_107, %c56_108], %97 {strides = array<i32>} : memref<1x4x4x64xf32, #tpu.memory_space<vmem>>, vector<1x1x4x8xf32>,
    %c1 = arith.constant 1 : index
    %c0_109 = arith.constant 0 : index
    %c0_110 = arith.constant 0 : index
    %98 = vector.load %arg4[%c1, %c0_109, %c0_110] : memref<2x16x8xf32, #tpu.memory_space<vmem>>, vector<1x16x8xf32>
    %99 = vector.shape_cast %98 : vector<1x16x8xf32> to vector<16x8xf32>
    %c0_111 = arith.constant 0 : index
    %c0_112 = arith.constant 0 : index
    %c0_113 = arith.constant 0 : index
    %100 = vector.load %arg3[%c0_111, %c0_112, %c0_113] : memref<1x4x256xf32, #tpu.memory_space<vmem>>, vector<1x4x16xf32>
    %101 = vector.shape_cast %100 : vector<1x4x16xf32> to vector<4x16xf32>
    %cst_114 = arith.constant dense<0.000000e+00> : vector<4x8xf32>
    %102 = tpu.matmul %101, %99, %cst_114 {dimension_numbers = #tpu.dot_dimension_numbers<[1], [0], [0], [1], [0, 0, 1, 1], [], []>} : vector<4x16xf32>, vector<16x8xf32>, vector<4x8xf32> -> vector<4x8xf32>
    %c0_115 = arith.constant 0 : index
    %c1_116 = arith.constant 1 : index
    %c0_117 = arith.constant 0 : index
    %c0_118 = arith.constant 0 : index
    %103 = vector.load %arg5[%c0_115, %c1_116, %c0_117, %c0_118] : memref<1x4x4x64xf32, #tpu.memory_space<vmem>>, vector<1x1x4x8xf32>
    %104 = vector.shape_cast %103 : vector<1x1x4x8xf32> to vector<4x8xf32>
    %105 = vector.shape_cast %102 : vector<4x8xf32> to vector<1x1x4x8xf32>
    tpu.vector_store %arg5[%c0_115, %c1_116, %c0_117, %c0_118], %105 {strides = array<i32>} : memref<1x4x4x64xf32, #tpu.memory_space<vmem>>, vector<1x1x4x8xf32>,
    %c0_119 = arith.constant 0 : index
    %c0_120 = arith.constant 0 : index
    %c32_121 = arith.constant 32 : index
    %106 = vector.load %arg3[%c0_119, %c0_120, %c32_121] : memref<1x4x256xf32, #tpu.memory_space<vmem>>, vector<1x4x16xf32>
    %107 = vector.shape_cast %106 : vector<1x4x16xf32> to vector<4x16xf32>
    %cst_122 = arith.constant dense<0.000000e+00> : vector<4x8xf32>
    %108 = tpu.matmul %107, %99, %cst_122 {dimension_numbers = #tpu.dot_dimension_numbers<[1], [0], [0], [1], [0, 0, 1, 1], [], []>} : vector<4x16xf32>, vector<16x8xf32>, vector<4x8xf32> -> vector<4x8xf32>
    %c0_123 = arith.constant 0 : index
    %c1_124 = arith.constant 1 : index
    %c0_125 = arith.constant 0 : index
    %c8_126 = arith.constant 8 : index
    %109 = vector.load %arg5[%c0_123, %c1_124, %c0_125, %c8_126] : memref<1x4x4x64xf32, #tpu.memory_space<vmem>>, vector<1x1x4x8xf32>
    %110 = vector.shape_cast %109 : vector<1x1x4x8xf32> to vector<4x8xf32>
    %111 = vector.shape_cast %108 : vector<4x8xf32> to vector<1x1x4x8xf32>
    tpu.vector_store %arg5[%c0_123, %c1_124, %c0_125, %c8_126], %111 {strides = array<i32>} : memref<1x4x4x64xf32, #tpu.memory_space<vmem>>, vector<1x1x4x8xf32>,
    %c0_127 = arith.constant 0 : index
    %c0_128 = arith.constant 0 : index
    %c64_129 = arith.constant 64 : index
    %112 = vector.load %arg3[%c0_127, %c0_128, %c64_129] : memref<1x4x256xf32, #tpu.memory_space<vmem>>, vector<1x4x16xf32>
    %113 = vector.shape_cast %112 : vector<1x4x16xf32> to vector<4x16xf32>
    %cst_130 = arith.constant dense<0.000000e+00> : vector<4x8xf32>
    %114 = tpu.matmul %113, %99, %cst_130 {dimension_numbers = #tpu.dot_dimension_numbers<[1], [0], [0], [1], [0, 0, 1, 1], [], []>} : vector<4x16xf32>, vector<16x8xf32>, vector<4x8xf32> -> vector<4x8xf32>
    %c0_131 = arith.constant 0 : index
    %c1_132 = arith.constant 1 : index
    %c0_133 = arith.constant 0 : index
    %c16_134 = arith.constant 16 : index
    %115 = vector.load %arg5[%c0_131, %c1_132, %c0_133, %c16_134] : memref<1x4x4x64xf32, #tpu.memory_space<vmem>>, vector<1x1x4x8xf32>
    %116 = vector.shape_cast %115 : vector<1x1x4x8xf32> to vector<4x8xf32>
    %117 = vector.shape_cast %114 : vector<4x8xf32> to vector<1x1x4x8xf32>
    tpu.vector_store %arg5[%c0_131, %c1_132, %c0_133, %c16_134], %117 {strides = array<i32>} : memref<1x4x4x64xf32, #tpu.memory_space<vmem>>, vector<1x1x4x8xf32>,
    %c0_135 = arith.constant 0 : index
    %c0_136 = arith.constant 0 : index
    %c96_137 = arith.constant 96 : index
    %118 = vector.load %arg3[%c0_135, %c0_136, %c96_137] : memref<1x4x256xf32, #tpu.memory_space<vmem>>, vector<1x4x16xf32>
    %119 = vector.shape_cast %118 : vector<1x4x16xf32> to vector<4x16xf32>
    %cst_138 = arith.constant dense<0.000000e+00> : vector<4x8xf32>
    %120 = tpu.matmul %119, %99, %cst_138 {dimension_numbers = #tpu.dot_dimension_numbers<[1], [0], [0], [1], [0, 0, 1, 1], [], []>} : vector<4x16xf32>, vector<16x8xf32>, vector<4x8xf32> -> vector<4x8xf32>
    %c0_139 = arith.constant 0 : index
    %c1_140 = arith.constant 1 : index
    %c0_141 = arith.constant 0 : index
    %c24_142 = arith.constant 24 : index
    %121 = vector.load %arg5[%c0_139, %c1_140, %c0_141, %c24_142] : memref<1x4x4x64xf32, #tpu.memory_space<vmem>>, vector<1x1x4x8xf32>
    %122 = vector.shape_cast %121 : vector<1x1x4x8xf32> to vector<4x8xf32>
    %123 = vector.shape_cast %120 : vector<4x8xf32> to vector<1x1x4x8xf32>
    tpu.vector_store %arg5[%c0_139, %c1_140, %c0_141, %c24_142], %123 {strides = array<i32>} : memref<1x4x4x64xf32, #tpu.memory_space<vmem>>, vector<1x1x4x8xf32>,
    %c0_143 = arith.constant 0 : index
    %c0_144 = arith.constant 0 : index
    %c128_145 = arith.constant 128 : index
    %124 = vector.load %arg3[%c0_143, %c0_144, %c128_145] : memref<1x4x256xf32, #tpu.memory_space<vmem>>, vector<1x4x16xf32>
    %125 = vector.shape_cast %124 : vector<1x4x16xf32> to vector<4x16xf32>
    %cst_146 = arith.constant dense<0.000000e+00> : vector<4x8xf32>
    %126 = tpu.matmul %125, %99, %cst_146 {dimension_numbers = #tpu.dot_dimension_numbers<[1], [0], [0], [1], [0, 0, 1, 1], [], []>} : vector<4x16xf32>, vector<16x8xf32>, vector<4x8xf32> -> vector<4x8xf32>
    %c0_147 = arith.constant 0 : index
    %c1_148 = arith.constant 1 : index
    %c0_149 = arith.constant 0 : index
    %c32_150 = arith.constant 32 : index
    %127 = vector.load %arg5[%c0_147, %c1_148, %c0_149, %c32_150] : memref<1x4x4x64xf32, #tpu.memory_space<vmem>>, vector<1x1x4x8xf32>
    %128 = vector.shape_cast %127 : vector<1x1x4x8xf32> to vector<4x8xf32>
    %129 = vector.shape_cast %126 : vector<4x8xf32> to vector<1x1x4x8xf32>
    tpu.vector_store %arg5[%c0_147, %c1_148, %c0_149, %c32_150], %129 {strides = array<i32>} : memref<1x4x4x64xf32, #tpu.memory_space<vmem>>, vector<1x1x4x8xf32>,
    %c0_151 = arith.constant 0 : index
    %c0_152 = arith.constant 0 : index
    %c160_153 = arith.constant 160 : index
    %130 = vector.load %arg3[%c0_151, %c0_152, %c160_153] : memref<1x4x256xf32, #tpu.memory_space<vmem>>, vector<1x4x16xf32>
    %131 = vector.shape_cast %130 : vector<1x4x16xf32> to vector<4x16xf32>
    %cst_154 = arith.constant dense<0.000000e+00> : vector<4x8xf32>
    %132 = tpu.matmul %131, %99, %cst_154 {dimension_numbers = #tpu.dot_dimension_numbers<[1], [0], [0], [1], [0, 0, 1, 1], [], []>} : vector<4x16xf32>, vector<16x8xf32>, vector<4x8xf32> -> vector<4x8xf32>
    %c0_155 = arith.constant 0 : index
    %c1_156 = arith.constant 1 : index
    %c0_157 = arith.constant 0 : index
    %c40_158 = arith.constant 40 : index
    %133 = vector.load %arg5[%c0_155, %c1_156, %c0_157, %c40_158] : memref<1x4x4x64xf32, #tpu.memory_space<vmem>>, vector<1x1x4x8xf32>
    %134 = vector.shape_cast %133 : vector<1x1x4x8xf32> to vector<4x8xf32>
    %135 = vector.shape_cast %132 : vector<4x8xf32> to vector<1x1x4x8xf32>
    tpu.vector_store %arg5[%c0_155, %c1_156, %c0_157, %c40_158], %135 {strides = array<i32>} : memref<1x4x4x64xf32, #tpu.memory_space<vmem>>, vector<1x1x4x8xf32>,
    %c0_159 = arith.constant 0 : index
    %c0_160 = arith.constant 0 : index
    %c192_161 = arith.constant 192 : index
    %136 = vector.load %arg3[%c0_159, %c0_160, %c192_161] : memref<1x4x256xf32, #tpu.memory_space<vmem>>, vector<1x4x16xf32>
    %137 = vector.shape_cast %136 : vector<1x4x16xf32> to vector<4x16xf32>
    %cst_162 = arith.constant dense<0.000000e+00> : vector<4x8xf32>
    %138 = tpu.matmul %137, %99, %cst_162 {dimension_numbers = #tpu.dot_dimension_numbers<[1], [0], [0], [1], [0, 0, 1, 1], [], []>} : vector<4x16xf32>, vector<16x8xf32>, vector<4x8xf32> -> vector<4x8xf32>
    %c0_163 = arith.constant 0 : index
    %c1_164 = arith.constant 1 : index
    %c0_165 = arith.constant 0 : index
    %c48_166 = arith.constant 48 : index
    %139 = vector.load %arg5[%c0_163, %c1_164, %c0_165, %c48_166] : memref<1x4x4x64xf32, #tpu.memory_space<vmem>>, vector<1x1x4x8xf32>
    %140 = vector.shape_cast %139 : vector<1x1x4x8xf32> to vector<4x8xf32>
    %141 = vector.shape_cast %138 : vector<4x8xf32> to vector<1x1x4x8xf32>
    tpu.vector_store %arg5[%c0_163, %c1_164, %c0_165, %c48_166], %141 {strides = array<i32>} : memref<1x4x4x64xf32, #tpu.memory_space<vmem>>, vector<1x1x4x8xf32>,
    %c0_167 = arith.constant 0 : index
    %c0_168 = arith.constant 0 : index
    %c224_169 = arith.constant 224 : index
    %142 = vector.load %arg3[%c0_167, %c0_168, %c224_169] : memref<1x4x256xf32, #tpu.memory_space<vmem>>, vector<1x4x16xf32>
    %143 = vector.shape_cast %142 : vector<1x4x16xf32> to vector<4x16xf32>
    %cst_170 = arith.constant dense<0.000000e+00> : vector<4x8xf32>
    %144 = tpu.matmul %143, %99, %cst_170 {dimension_numbers = #tpu.dot_dimension_numbers<[1], [0], [0], [1], [0, 0, 1, 1], [], []>} : vector<4x16xf32>, vector<16x8xf32>, vector<4x8xf32> -> vector<4x8xf32>
    %c0_171 = arith.constant 0 : index
    %c1_172 = arith.constant 1 : index
    %c0_173 = arith.constant 0 : index
    %c56_174 = arith.constant 56 : index
    %145 = vector.load %arg5[%c0_171, %c1_172, %c0_173, %c56_174] : memref<1x4x4x64xf32, #tpu.memory_space<vmem>>, vector<1x1x4x8xf32>
    %146 = vector.shape_cast %145 : vector<1x1x4x8xf32> to vector<4x8xf32>
    %147 = vector.shape_cast %144 : vector<4x8xf32> to vector<1x1x4x8xf32>
    tpu.vector_store %arg5[%c0_171, %c1_172, %c0_173, %c56_174], %147 {strides = array<i32>} : memref<1x4x4x64xf32, #tpu.memory_space<vmem>>, vector<1x1x4x8xf32>,
    %c0_175 = arith.constant 0 : index
    %c0_176 = arith.constant 0 : index
    %c16_177 = arith.constant 16 : index
    %148 = vector.load %arg3[%c0_175, %c0_176, %c16_177] : memref<1x4x256xf32, #tpu.memory_space<vmem>>, vector<1x4x16xf32>
    %149 = vector.shape_cast %148 : vector<1x4x16xf32> to vector<4x16xf32>
    %cst_178 = arith.constant dense<0.000000e+00> : vector<4x8xf32>
    %150 = tpu.matmul %149, %99, %cst_178 {dimension_numbers = #tpu.dot_dimension_numbers<[1], [0], [0], [1], [0, 0, 1, 1], [], []>} : vector<4x16xf32>, vector<16x8xf32>, vector<4x8xf32> -> vector<4x8xf32>
    %c0_179 = arith.constant 0 : index
    %c3 = arith.constant 3 : index
    %c0_180 = arith.constant 0 : index
    %c0_181 = arith.constant 0 : index
    %151 = vector.load %arg5[%c0_179, %c3, %c0_180, %c0_181] : memref<1x4x4x64xf32, #tpu.memory_space<vmem>>, vector<1x1x4x8xf32>
    %152 = vector.shape_cast %151 : vector<1x1x4x8xf32> to vector<4x8xf32>
    %153 = vector.shape_cast %150 : vector<4x8xf32> to vector<1x1x4x8xf32>
    tpu.vector_store %arg5[%c0_179, %c3, %c0_180, %c0_181], %153 {strides = array<i32>} : memref<1x4x4x64xf32, #tpu.memory_space<vmem>>, vector<1x1x4x8xf32>,
    %c0_182 = arith.constant 0 : index
    %c0_183 = arith.constant 0 : index
    %c48_184 = arith.constant 48 : index
    %154 = vector.load %arg3[%c0_182, %c0_183, %c48_184] : memref<1x4x256xf32, #tpu.memory_space<vmem>>, vector<1x4x16xf32>
    %155 = vector.shape_cast %154 : vector<1x4x16xf32> to vector<4x16xf32>
    %cst_185 = arith.constant dense<0.000000e+00> : vector<4x8xf32>
    %156 = tpu.matmul %155, %99, %cst_185 {dimension_numbers = #tpu.dot_dimension_numbers<[1], [0], [0], [1], [0, 0, 1, 1], [], []>} : vector<4x16xf32>, vector<16x8xf32>, vector<4x8xf32> -> vector<4x8xf32>
    %c0_186 = arith.constant 0 : index
    %c3_187 = arith.constant 3 : index
    %c0_188 = arith.constant 0 : index
    %c8_189 = arith.constant 8 : index
    %157 = vector.load %arg5[%c0_186, %c3_187, %c0_188, %c8_189] : memref<1x4x4x64xf32, #tpu.memory_space<vmem>>, vector<1x1x4x8xf32>
    %158 = vector.shape_cast %157 : vector<1x1x4x8xf32> to vector<4x8xf32>
    %159 = vector.shape_cast %156 : vector<4x8xf32> to vector<1x1x4x8xf32>
    tpu.vector_store %arg5[%c0_186, %c3_187, %c0_188, %c8_189], %159 {strides = array<i32>} : memref<1x4x4x64xf32, #tpu.memory_space<vmem>>, vector<1x1x4x8xf32>,
    %c0_190 = arith.constant 0 : index
    %c0_191 = arith.constant 0 : index
    %c80_192 = arith.constant 80 : index
    %160 = vector.load %arg3[%c0_190, %c0_191, %c80_192] : memref<1x4x256xf32, #tpu.memory_space<vmem>>, vector<1x4x16xf32>
    %161 = vector.shape_cast %160 : vector<1x4x16xf32> to vector<4x16xf32>
    %cst_193 = arith.constant dense<0.000000e+00> : vector<4x8xf32>
    %162 = tpu.matmul %161, %99, %cst_193 {dimension_numbers = #tpu.dot_dimension_numbers<[1], [0], [0], [1], [0, 0, 1, 1], [], []>} : vector<4x16xf32>, vector<16x8xf32>, vector<4x8xf32> -> vector<4x8xf32>
    %c0_194 = arith.constant 0 : index
    %c3_195 = arith.constant 3 : index
    %c0_196 = arith.constant 0 : index
    %c16_197 = arith.constant 16 : index
    %163 = vector.load %arg5[%c0_194, %c3_195, %c0_196, %c16_197] : memref<1x4x4x64xf32, #tpu.memory_space<vmem>>, vector<1x1x4x8xf32>
    %164 = vector.shape_cast %163 : vector<1x1x4x8xf32> to vector<4x8xf32>
    %165 = vector.shape_cast %162 : vector<4x8xf32> to vector<1x1x4x8xf32>
    tpu.vector_store %arg5[%c0_194, %c3_195, %c0_196, %c16_197], %165 {strides = array<i32>} : memref<1x4x4x64xf32, #tpu.memory_space<vmem>>, vector<1x1x4x8xf32>,
    %c0_198 = arith.constant 0 : index
    %c0_199 = arith.constant 0 : index
    %c112_200 = arith.constant 112 : index
    %166 = vector.load %arg3[%c0_198, %c0_199, %c112_200] : memref<1x4x256xf32, #tpu.memory_space<vmem>>, vector<1x4x16xf32>
    %167 = vector.shape_cast %166 : vector<1x4x16xf32> to vector<4x16xf32>
    %cst_201 = arith.constant dense<0.000000e+00> : vector<4x8xf32>
    %168 = tpu.matmul %167, %99, %cst_201 {dimension_numbers = #tpu.dot_dimension_numbers<[1], [0], [0], [1], [0, 0, 1, 1], [], []>} : vector<4x16xf32>, vector<16x8xf32>, vector<4x8xf32> -> vector<4x8xf32>
    %c0_202 = arith.constant 0 : index
    %c3_203 = arith.constant 3 : index
    %c0_204 = arith.constant 0 : index
    %c24_205 = arith.constant 24 : index
    %169 = vector.load %arg5[%c0_202, %c3_203, %c0_204, %c24_205] : memref<1x4x4x64xf32, #tpu.memory_space<vmem>>, vector<1x1x4x8xf32>
    %170 = vector.shape_cast %169 : vector<1x1x4x8xf32> to vector<4x8xf32>
    %171 = vector.shape_cast %168 : vector<4x8xf32> to vector<1x1x4x8xf32>
    tpu.vector_store %arg5[%c0_202, %c3_203, %c0_204, %c24_205], %171 {strides = array<i32>} : memref<1x4x4x64xf32, #tpu.memory_space<vmem>>, vector<1x1x4x8xf32>,
    %c0_206 = arith.constant 0 : index
    %c0_207 = arith.constant 0 : index
    %c144_208 = arith.constant 144 : index
    %172 = vector.load %arg3[%c0_206, %c0_207, %c144_208] : memref<1x4x256xf32, #tpu.memory_space<vmem>>, vector<1x4x16xf32>
    %173 = vector.shape_cast %172 : vector<1x4x16xf32> to vector<4x16xf32>
    %cst_209 = arith.constant dense<0.000000e+00> : vector<4x8xf32>
    %174 = tpu.matmul %173, %99, %cst_209 {dimension_numbers = #tpu.dot_dimension_numbers<[1], [0], [0], [1], [0, 0, 1, 1], [], []>} : vector<4x16xf32>, vector<16x8xf32>, vector<4x8xf32> -> vector<4x8xf32>
    %c0_210 = arith.constant 0 : index
    %c3_211 = arith.constant 3 : index
    %c0_212 = arith.constant 0 : index
    %c32_213 = arith.constant 32 : index
    %175 = vector.load %arg5[%c0_210, %c3_211, %c0_212, %c32_213] : memref<1x4x4x64xf32, #tpu.memory_space<vmem>>, vector<1x1x4x8xf32>
    %176 = vector.shape_cast %175 : vector<1x1x4x8xf32> to vector<4x8xf32>
    %177 = vector.shape_cast %174 : vector<4x8xf32> to vector<1x1x4x8xf32>
    tpu.vector_store %arg5[%c0_210, %c3_211, %c0_212, %c32_213], %177 {strides = array<i32>} : memref<1x4x4x64xf32, #tpu.memory_space<vmem>>, vector<1x1x4x8xf32>,
    %c0_214 = arith.constant 0 : index
    %c0_215 = arith.constant 0 : index
    %c176_216 = arith.constant 176 : index
    %178 = vector.load %arg3[%c0_214, %c0_215, %c176_216] : memref<1x4x256xf32, #tpu.memory_space<vmem>>, vector<1x4x16xf32>
    %179 = vector.shape_cast %178 : vector<1x4x16xf32> to vector<4x16xf32>
    %cst_217 = arith.constant dense<0.000000e+00> : vector<4x8xf32>
    %180 = tpu.matmul %179, %99, %cst_217 {dimension_numbers = #tpu.dot_dimension_numbers<[1], [0], [0], [1], [0, 0, 1, 1], [], []>} : vector<4x16xf32>, vector<16x8xf32>, vector<4x8xf32> -> vector<4x8xf32>
    %c0_218 = arith.constant 0 : index
    %c3_219 = arith.constant 3 : index
    %c0_220 = arith.constant 0 : index
    %c40_221 = arith.constant 40 : index
    %181 = vector.load %arg5[%c0_218, %c3_219, %c0_220, %c40_221] : memref<1x4x4x64xf32, #tpu.memory_space<vmem>>, vector<1x1x4x8xf32>
    %182 = vector.shape_cast %181 : vector<1x1x4x8xf32> to vector<4x8xf32>
    %183 = vector.shape_cast %180 : vector<4x8xf32> to vector<1x1x4x8xf32>
    tpu.vector_store %arg5[%c0_218, %c3_219, %c0_220, %c40_221], %183 {strides = array<i32>} : memref<1x4x4x64xf32, #tpu.memory_space<vmem>>, vector<1x1x4x8xf32>,
    %c0_222 = arith.constant 0 : index
    %c0_223 = arith.constant 0 : index
    %c208_224 = arith.constant 208 : index
    %184 = vector.load %arg3[%c0_222, %c0_223, %c208_224] : memref<1x4x256xf32, #tpu.memory_space<vmem>>, vector<1x4x16xf32>
    %185 = vector.shape_cast %184 : vector<1x4x16xf32> to vector<4x16xf32>
    %cst_225 = arith.constant dense<0.000000e+00> : vector<4x8xf32>
    %186 = tpu.matmul %185, %99, %cst_225 {dimension_numbers = #tpu.dot_dimension_numbers<[1], [0], [0], [1], [0, 0, 1, 1], [], []>} : vector<4x16xf32>, vector<16x8xf32>, vector<4x8xf32> -> vector<4x8xf32>
    %c0_226 = arith.constant 0 : index
    %c3_227 = arith.constant 3 : index
    %c0_228 = arith.constant 0 : index
    %c48_229 = arith.constant 48 : index
    %187 = vector.load %arg5[%c0_226, %c3_227, %c0_228, %c48_229] : memref<1x4x4x64xf32, #tpu.memory_space<vmem>>, vector<1x1x4x8xf32>
    %188 = vector.shape_cast %187 : vector<1x1x4x8xf32> to vector<4x8xf32>
    %189 = vector.shape_cast %186 : vector<4x8xf32> to vector<1x1x4x8xf32>
    tpu.vector_store %arg5[%c0_226, %c3_227, %c0_228, %c48_229], %189 {strides = array<i32>} : memref<1x4x4x64xf32, #tpu.memory_space<vmem>>, vector<1x1x4x8xf32>,
    %c0_230 = arith.constant 0 : index
    %c0_231 = arith.constant 0 : index
    %c240_232 = arith.constant 240 : index
    %190 = vector.load %arg3[%c0_230, %c0_231, %c240_232] : memref<1x4x256xf32, #tpu.memory_space<vmem>>, vector<1x4x16xf32>
    %191 = vector.shape_cast %190 : vector<1x4x16xf32> to vector<4x16xf32>
    %cst_233 = arith.constant dense<0.000000e+00> : vector<4x8xf32>
    %192 = tpu.matmul %191, %99, %cst_233 {dimension_numbers = #tpu.dot_dimension_numbers<[1], [0], [0], [1], [0, 0, 1, 1], [], []>} : vector<4x16xf32>, vector<16x8xf32>, vector<4x8xf32> -> vector<4x8xf32>
    %c0_234 = arith.constant 0 : index
    %c3_235 = arith.constant 3 : index
    %c0_236 = arith.constant 0 : index
    %c56_237 = arith.constant 56 : index
    %193 = vector.load %arg5[%c0_234, %c3_235, %c0_236, %c56_237] : memref<1x4x4x64xf32, #tpu.memory_space<vmem>>, vector<1x1x4x8xf32>
    %194 = vector.shape_cast %193 : vector<1x1x4x8xf32> to vector<4x8xf32>
    %195 = vector.shape_cast %192 : vector<4x8xf32> to vector<1x1x4x8xf32>
    tpu.vector_store %arg5[%c0_234, %c3_235, %c0_236, %c56_237], %195 {strides = array<i32>} : memref<1x4x4x64xf32, #tpu.memory_space<vmem>>, vector<1x1x4x8xf32>,
    return
  }
  func.func @transform_0(%arg0: i32, %arg1: i32, %arg2: i32) -> (i32, i32, i32) {
    %c0_i32 = arith.constant 0 : i32
    return %arg0, %arg1, %arg2 : i32, i32, i32
  }
  func.func @transform_1(%arg0: i32, %arg1: i32, %arg2: i32) -> (i32, i32, i32) {
    %c0_i32 = arith.constant 0 : i32
    %c0_i32_0 = arith.constant 0 : i32
    %c0_i32_1 = arith.constant 0 : i32
    %c0_i32_2 = arith.constant 0 : i32
    return %c0_i32, %c0_i32_0, %c0_i32_1 : i32, i32, i32
  }
  func.func @transform_2(%arg0: i32, %arg1: i32, %arg2: i32) -> (i32, i32, i32, i32) {
    %c0_i32 = arith.constant 0 : i32
    %c0_i32_0 = arith.constant 0 : i32
    return %arg0, %c0_i32, %arg1, %arg2 : i32, i32, i32, i32
  }
}

</mosaic_0001>

<llo_original>
// kernel: tpu_custom_call.1
$region0: #{tpu_custom_call.1}
  #allocation0 [shape = 'u32[]', space=smem, size = 0x4, offset = 0x4, fixed_abs, tag = 'smem constant byte address 0x4 - core index']
  #allocation1 [shape = 'u32[72,128]{1,0:T(1,128)}', space=vmem, size = 0x9000, scoped, tag = 'internal scratch']
  %s0 = inlined_call_operand.vmem [shape: f32[2,4,256], index: 0, kind: input, shape index: {}]
  %s1 = inlined_call_operand.vmem [shape: f32[2,16,8], index: 1, kind: input, shape index: {}]
  %s2 = inlined_call_operand.hbm [shape: f32[2,4,4,64], index: 2, kind: output, shape index: {}]
  %s3 = sld [smem:[#allocation0]]
  $region41: #{tpu_custom_call.1} parent=0
    _
  %s5 = ssub.s32 1, %s3
  %s6 = scalar_select 0, %s5, %s3
  $region1: #{tpu_custom_call.1} parent=0
    #allocation2 [shape = 'u8[16384]{0}', space=vmem, size = 0x4000, scoped, tag = 'output window, operand 0']
    #allocation3 [shape = 's32[2]{0}', space=sflag, size = 0x8, scoped, tag = 'scoped memory for tpu_custom_call.1']
    %7 = vsyncpa [#allocation3], 0
    %s8 = scalar_lea.sflag [#allocation3], 1
    %9 = vsyncpa %s8, 0
    loop: start=0, step=1, limit=4
    $region2: #{tpu_custom_call.1} parent=1 // loop_pre_header
      _
    $region3: #{tpu_custom_call.1} parent=1 // loop_header
      %s11 = sphi 0, %s15
      %p12 = scmp.ge.s32.totalorder %s11, 4
      %s18 = sphi 0, %s37
      %s19 = sphi 0, %s33
      %s20 = sphi 0, %s29
      %s21 = sphi 0, %s18
      %s22 = sphi 0, %s19
      %s23 = sphi 0, %s20
      %s24 = sphi 0, %s21
      %s25 = sphi 0, %s22
      %s26 = sphi 0, %s23
      %s44 = sphi 0, %s46
      %s47 = sphi 0, %s44
      %s48 = sphi 0, %s47
      %s64 = sphi 0, %s48
      %s68 = sphi 0, %s68
      %s70 = sphi 0, %s68
      %s71 = sphi 0, %s70
      %s85 = sphi 0, %s71
      %s95 = sphi 0, %s97
      %s98 = sphi 0, %s95
      %s99 = sphi 0, %s98
      %s115 = sphi 0, %s99
    $region4: #{tpu_custom_call.1} parent=1 // loop_header_branch
      %14 = sbr.rel (%p12) target = $region8
    $region5: #{tpu_custom_call.1} parent=1 // loop_body
      %s16 = ssub.s32 %s11, 1
      %s17 = ssub.s32 %s11, 2
      %s27 = sadd.s32 1, %s20
      %p28 = scmp.ge.s32.totalorder %s27, 1
      %s29 = scalar_select %p28, 0, %s27
      %s30 = sadd.s32 1, %s19
      %s31 = scalar_select %p28, %s30, %s19
      %p32 = scmp.ge.s32.totalorder %s31, 1
      %s33 = scalar_select %p32, 0, %s31
      %s34 = sadd.s32 1, %s18
      %s35 = scalar_select %p32, %s34, %s18
      %p36 = scmp.ge.s32.totalorder %s35, 2
      %s37 = scalar_select %p36, 0, %s35
      %s38 = ssub.s32 %s18, %s37
      %s39 = ssub.s32 %s19, %s33
      %s40 = sor.u32 %s38, %s39
      %s41 = ssub.s32 %s20, %s29
      %s42 = sor.u32 %s40, %s41
      %p43 = scmp.eq.s32.totalorder %s42, 0
      %s45 = sadd.s32 %s44, 1
      %s46 = scalar_select %p43, %s44, %s45
      %p49 = pneg %p43
      %p50 = scmp.eq.s32.totalorder %s11, 1
      %p51 = por %p49, %p50
      %p52 = scmp.ne.s32.totalorder %s44, %s47
      %p53 = scmp.eq.s32.totalorder %s11, 0
      %p54 = por %p52, %p53
      %p55 = scmp.ne.s32.totalorder %s44, %s47
      %p56 = scmp.eq.s32.totalorder %s16, 1
      %p57 = por %p55, %p56
      %p58 = scmp.ne.s32.totalorder %s47, %s48
      %p59 = scmp.eq.s32.totalorder %s16, 0
      %p60 = por %p58, %p59
      %p61 = scmp.ne.s32.totalorder %s47, %s48
      %p62 = scmp.eq.s32.totalorder %s17, 1
      %p63 = por %p61, %p62
      %p65 = scmp.ne.s32.totalorder %s48, %s64
      %p66 = scmp.eq.s32.totalorder %s17, 0
      %p67 = por %p65, %p66
      %s69 = sadd.s32 %s68, 1
      %p72 = scmp.eq.s32.totalorder %s11, 1
      %p73 = scmp.ne.s32.totalorder %s68, %s70
      %p74 = scmp.eq.s32.totalorder %s11, 0
      %p75 = por %p73, %p74
      %p76 = scmp.ne.s32.totalorder %s68, %s70
      %p77 = scmp.eq.s32.totalorder %s16, 1
      %p78 = por %p76, %p77
      %p79 = scmp.ne.s32.totalorder %s70, %s71
      %p80 = scmp.eq.s32.totalorder %s16, 0
      %p81 = por %p79, %p80
      %p82 = scmp.ne.s32.totalorder %s70, %s71
      %p83 = scmp.eq.s32.totalorder %s17, 1
      %p84 = por %p82, %p83
      %p86 = scmp.ne.s32.totalorder %s71, %s85
      %p87 = scmp.eq.s32.totalorder %s17, 0
      %p88 = por %p86, %p87
      %s89 = ssub.s32 %s18, %s37
      %s90 = ssub.s32 %s19, %s33
      %s91 = sor.u32 %s89, %s90
      %s92 = ssub.s32 %s20, %s29
      %s93 = sor.u32 %s91, %s92
      %p94 = scmp.eq.s32.totalorder %s93, 0
      %s96 = sadd.s32 %s95, 1
      %s97 = scalar_select %p94, %s95, %s96
      %p100 = pneg %p94
      %p101 = scmp.eq.s32.totalorder %s11, 1
      %p102 = por %p100, %p101
      %p103 = scmp.ne.s32.totalorder %s95, %s98
      %p104 = scmp.eq.s32.totalorder %s11, 0
      %p105 = por %p103, %p104
      %p106 = scmp.ne.s32.totalorder %s95, %s98
      %p107 = scmp.eq.s32.totalorder %s16, 1
      %p108 = por %p106, %p107
      %p109 = scmp.ne.s32.totalorder %s98, %s99
      %p110 = scmp.eq.s32.totalorder %s16, 0
      %p111 = por %p109, %p110
      %p112 = scmp.ne.s32.totalorder %s98, %s99
      %p113 = scmp.eq.s32.totalorder %s17, 1
      %p114 = por %p112, %p113
      %p116 = scmp.ne.s32.totalorder %s99, %s115
      %p117 = scmp.eq.s32.totalorder %s17, 0
      %p118 = por %p116, %p117
      %p119 = scmp.le.s32.totalorder 1, %s11
      %p120 = scmp.lt.s32.totalorder %s11, 3
      %p121 = pnand %p119, %p120
      %p122 = pneg %p121
      // Predicated region
      $region9: #{tpu_custom_call.1} parent=5 // pred_check
        _
      $region10: #{tpu_custom_call.1} parent=5 // pred_check_branch
        %124 = sbr.rel (%p121) target = $region12
      $region11: #{tpu_custom_call.1} parent=5 // pred_region
        %s125 = ssub.s32 %s11, 1
        // Predicated region
        $region13: #{tpu_custom_call.1} parent=11 // pred_check
          %p126 = pneg %p81
        $region14: #{tpu_custom_call.1} parent=11 // pred_check_branch
          %128 = sbr.rel (%p126) target = $region16
        $region15: #{tpu_custom_call.1} parent=11 // pred_region
          _
        $region16: #{tpu_custom_call.1} parent=11 // pred_fallthru
          _
      $region12: #{tpu_custom_call.1} parent=5 // pred_fallthru
        _
      %p129 = scmp.lt.s32.totalorder %s11, 2
      // Predicated region
      $region17: #{tpu_custom_call.1} parent=5 // pred_check
        %p130 = pneg %p129
      $region18: #{tpu_custom_call.1} parent=5 // pred_check_branch
        %132 = sbr.rel (%p130) target = $region20
      $region19: #{tpu_custom_call.1} parent=5 // pred_region
        // Predicated region
        $region21: #{tpu_custom_call.1} parent=19 // pred_check
          %p133 = pneg %p54
        $region22: #{tpu_custom_call.1} parent=19 // pred_check_branch
          %135 = sbr.rel (%p133) target = $region24
        $region23: #{tpu_custom_call.1} parent=19 // pred_region
          %s136 = smul.u32 2, %s20
          %p137 = scmp.lt.s32.totalorder %s18, 1
          %s138 = scalar_select %p137, %s18, 1
          %p139 = scmp.lt.s32.totalorder %s19, 0
          %s140 = scalar_select %p139, %s19, 0
          %p141 = scmp.lt.s32.totalorder %s136, 1
          %s142 = scalar_select %p141, %s136, 1
          %s143 = smul.addr %s140, 2
          %s144 = sadd.s32 %s142, %s143
          %s145 = smul.addr %s138, 2
          %s146 = sadd.s32 %s144, %s145
          %s147 = smul.addr %s146, 4
          %s148 = scalar_lea.vmem %s0, %s147
          %s149 = smul.u32 2, %s20
        $region24: #{tpu_custom_call.1} parent=19 // pred_fallthru
          _
      $region20: #{tpu_custom_call.1} parent=5 // pred_fallthru
        _
      %p150 = scmp.le.s32.totalorder 1, %s11
      %p151 = scmp.lt.s32.totalorder %s11, 3
      %p152 = pnand %p150, %p151
      %p153 = pneg %p152
      // Predicated region
      $region25: #{tpu_custom_call.1} parent=5 // pred_check
        _
      $region26: #{tpu_custom_call.1} parent=5 // pred_check_branch
        %155 = sbr.rel (%p152) target = $region28
      $region27: #{tpu_custom_call.1} parent=5 // pred_region
        %s156 = ssub.s32 %s11, 1
        %s157 = smul.u32 2, %s23
        %p158 = scmp.lt.s32.totalorder %s21, 1
        %s159 = scalar_select %p158, %s21, 1
        %p160 = scmp.lt.s32.totalorder %s22, 0
        %s161 = scalar_select %p160, %s22, 0
        %p162 = scmp.lt.s32.totalorder %s157, 1
        %s163 = scalar_select %p162, %s157, 1
        %s164 = smul.addr %s161, 2
        %s165 = sadd.s32 %s163, %s164
        %s166 = smul.addr %s159, 2
        %s167 = sadd.s32 %s165, %s166
        %s168 = smul.addr %s167, 4
        %s169 = scalar_lea.vmem %s0, %s168
        %p170 = pneg %p60
        %p171 = pneg %p57
        %p172 = pneg %p81
        %p173 = pneg %p78
        %p174 = pneg %p111
        %p175 = pneg %p108
        %s176 = sand.u32 %s98, 1
        %s177 = scalar_lea.sflag [#allocation3], %s176
        %s178 = sand.u32 %s98, 1
        %s179 = smul.addr %s178, 16
        %s180 = scalar_lea.vmem [#allocation2], %s179
        %s181 = smul.u32 2, %s23
        %p182 = scmp.lt.s32.totalorder %s21, 1
        %s183 = scalar_select %p182, %s21, 1
        %p184 = scmp.lt.s32.totalorder %s22, 0
        %s185 = scalar_select %p184, %s22, 0
        %p186 = scmp.lt.s32.totalorder %s181, 1
        %s187 = scalar_select %p186, %s181, 1
        %s188 = smul.addr %s185, 2
        %s189 = sadd.s32 %s187, %s188
        %s190 = smul.addr %s183, 2
        %s191 = sadd.s32 %s189, %s190
        %s192 = smul.addr %s191, 4
        %s193 = scalar_lea.vmem %s0, %s192
        %s194 = smul.u32 2, %s23
        %v195 = vld [vmem:[%s1] sm:$0xff]
        %v196 = vld [vmem:[%s1 + $0x8] sm:$0xff]
        %v197 = vld [vmem:[%s193] sm:$0xf]
        %vm198 = vcmask 130048
        %v200 = vsel %vm198, %v197, 0
        %202 = vmatpush.msra.mxu0 0.0
        %203 = vmatpush.msra.mxu0 0.0
        %204 = vmatpush.msra.mxu0 0.0
        %205 = vmatpush.msra.mxu0 0.0
        %206 = vmatpush.msra.mxu0 0.0
        %207 = vmatpush.msra.mxu0 0.0
        %208 = vmatpush.msra.mxu0 0.0
        %209 = vmatpush.msra.mxu0 0.0
        %210 = vmatpush.msra.mxu0 0.0
        %211 = vmatpush.msra.mxu0 0.0
        %212 = vmatpush.msra.mxu0 0.0
        %213 = vmatpush.msra.mxu0 0.0
        %214 = vmatpush.msra.mxu0 0.0
        %215 = vmatpush.msra.mxu0 0.0
        %216 = vmatpush.msra.mxu0 %v196
        %217 = vmatpush.msra.mxu0 %v195
        %218 = vmatmul.f32.gmra.mxu0 %v200
        %v219 = vpop.f32.mrf.mxu0
        %v220 = vadd.f32 0.0, %v219
        %221 = vdwg.mxu0
        %vm222 = vcmask 60416
        %223 = vst.msk [vmem:[%s180] sm:$0xf] %vm222, %v220
        %v224 = vld [vmem:[%s193] sm:$0xf]
        %226 = vst [vmem:[#allocation1] ss:$2 sm:$0xff] %v224
        %v227 = vld.sshfl [vmem:[#allocation1] sm:$0xff pattern:$0x75316420]
        %228 = vrot.lane.b32.xlu0 %v227, 96
        %v229 = vpop.permute.xlu0 %228
        %v230 = vsel %vm198, %v229, 0
        %232 = vmatpush.msra.mxu0 0.0
        %233 = vmatpush.msra.mxu0 0.0
        %234 = vmatpush.msra.mxu0 0.0
        %235 = vmatpush.msra.mxu0 0.0
        %236 = vmatpush.msra.mxu0 0.0
        %237 = vmatpush.msra.mxu0 0.0
        %238 = vmatpush.msra.mxu0 0.0
        %239 = vmatpush.msra.mxu0 0.0
        %240 = vmatpush.msra.mxu0 0.0
        %241 = vmatpush.msra.mxu0 0.0
        %242 = vmatpush.msra.mxu0 0.0
        %243 = vmatpush.msra.mxu0 0.0
        %244 = vmatpush.msra.mxu0 0.0
        %245 = vmatpush.msra.mxu0 0.0
        %246 = vmatpush.msra.mxu0 %v196
        %247 = vmatpush.msra.mxu0 %v195
        %248 = vmatmul.f32.gmra.mxu0 %v230
        %v249 = vpop.f32.mrf.mxu0
        %v250 = vadd.f32 0.0, %v249
        %251 = vdwg.mxu0
        %253 = vrot.lane.b32.xlu0 %v250, 8
        %v254 = vpop.permute.xlu0 %253
        %vm256 = vcmask 126016
        %257 = vst.msk [vmem:[%s180] sm:$0xf] %vm256, %v254
        %v258 = vld [vmem:[%s193] sm:$0xf]
        %260 = vst [vmem:[#allocation1] ss:$2 sm:$0xff] %v258
        %v261 = vld.sshfl [vmem:[#allocation1] sm:$0xff pattern:$0x75316420]
        %262 = vrot.lane.b32.xlu0 %v261, 64
        %v263 = vpop.permute.xlu0 %262
        %v264 = vsel %vm198, %v263, 0
        %266 = vmatpush.msra.mxu0 0.0
        %267 = vmatpush.msra.mxu0 0.0
        %268 = vmatpush.msra.mxu0 0.0
        %269 = vmatpush.msra.mxu0 0.0
        %270 = vmatpush.msra.mxu0 0.0
        %271 = vmatpush.msra.mxu0 0.0
        %272 = vmatpush.msra.mxu0 0.0
        %273 = vmatpush.msra.mxu0 0.0
        %274 = vmatpush.msra.mxu0 0.0
        %275 = vmatpush.msra.mxu0 0.0
        %276 = vmatpush.msra.mxu0 0.0
        %277 = vmatpush.msra.mxu0 0.0
        %278 = vmatpush.msra.mxu0 0.0
        %279 = vmatpush.msra.mxu0 0.0
        %280 = vmatpush.msra.mxu0 %v196
        %281 = vmatpush.msra.mxu0 %v195
        %282 = vmatmul.f32.gmra.mxu0 %v264
        %v283 = vpop.f32.mrf.mxu0
        %v284 = vadd.f32 0.0, %v283
        %285 = vdwg.mxu0
        %287 = vrot.lane.b32.xlu0 %v284, 16
        %v288 = vpop.permute.xlu0 %287
        %vm290 = vcmask 191616
        %291 = vst.msk [vmem:[%s180] sm:$0xf] %vm290, %v288
        %v292 = vld [vmem:[%s193] sm:$0xf]
        %294 = vst [vmem:[#allocation1] ss:$2 sm:$0xff] %v292
        %v295 = vld.sshfl [vmem:[#allocation1] sm:$0xff pattern:$0x75316420]
        %296 = vrot.lane.b32.xlu0 %v295, 32
        %v297 = vpop.permute.xlu0 %296
        %v298 = vsel %vm198, %v297, 0
        %300 = vmatpush.msra.mxu0 0.0
        %301 = vmatpush.msra.mxu0 0.0
        %302 = vmatpush.msra.mxu0 0.0
        %303 = vmatpush.msra.mxu0 0.0
        %304 = vmatpush.msra.mxu0 0.0
        %305 = vmatpush.msra.mxu0 0.0
        %306 = vmatpush.msra.mxu0 0.0
        %307 = vmatpush.msra.mxu0 0.0
        %308 = vmatpush.msra.mxu0 0.0
        %309 = vmatpush.msra.mxu0 0.0
        %310 = vmatpush.msra.mxu0 0.0
        %311 = vmatpush.msra.mxu0 0.0
        %312 = vmatpush.msra.mxu0 0.0
        %313 = vmatpush.msra.mxu0 0.0
        %314 = vmatpush.msra.mxu0 %v196
        %315 = vmatpush.msra.mxu0 %v195
        %316 = vmatmul.f32.gmra.mxu0 %v298
        %v317 = vpop.f32.mrf.mxu0
        %v318 = vadd.f32 0.0, %v317
        %319 = vdwg.mxu0
        %321 = vrot.lane.b32.xlu0 %v318, 24
        %v322 = vpop.permute.xlu0 %321
        %vm324 = vcmask 257216
        %325 = vst.msk [vmem:[%s180] sm:$0xf] %vm324, %v322
        %v326 = vld [vmem:[%s193 + $0x4] sm:$0xf]
        %v328 = vsel %vm198, %v326, 0
        %330 = vmatpush.msra.mxu0 0.0
        %331 = vmatpush.msra.mxu0 0.0
        %332 = vmatpush.msra.mxu0 0.0
        %333 = vmatpush.msra.mxu0 0.0
        %334 = vmatpush.msra.mxu0 0.0
        %335 = vmatpush.msra.mxu0 0.0
        %336 = vmatpush.msra.mxu0 0.0
        %337 = vmatpush.msra.mxu0 0.0
        %338 = vmatpush.msra.mxu0 0.0
        %339 = vmatpush.msra.mxu0 0.0
        %340 = vmatpush.msra.mxu0 0.0
        %341 = vmatpush.msra.mxu0 0.0
        %342 = vmatpush.msra.mxu0 0.0
        %343 = vmatpush.msra.mxu0 0.0
        %344 = vmatpush.msra.mxu0 %v196
        %345 = vmatpush.msra.mxu0 %v195
        %346 = vmatmul.f32.gmra.mxu0 %v328
        %v347 = vpop.f32.mrf.mxu0
        %v348 = vadd.f32 0.0, %v347
        %349 = vdwg.mxu0
        %351 = vrot.lane.b32.xlu0 %v348, 32
        %v352 = vpop.permute.xlu0 %351
        %vm354 = vcmask 322816
        %355 = vst.msk [vmem:[%s180] sm:$0xf] %vm354, %v352
        %v356 = vld [vmem:[%s193 + $0x4] sm:$0xf]
        %358 = vst [vmem:[#allocation1] ss:$2 sm:$0xff] %v356
        %v359 = vld.sshfl [vmem:[#allocation1] sm:$0xff pattern:$0x75316420]
        %360 = vrot.lane.b32.xlu0 %v359, 96
        %v361 = vpop.permute.xlu0 %360
        %v362 = vsel %vm198, %v361, 0
        %364 = vmatpush.msra.mxu0 0.0
        %365 = vmatpush.msra.mxu0 0.0
        %366 = vmatpush.msra.mxu0 0.0
        %367 = vmatpush.msra.mxu0 0.0
        %368 = vmatpush.msra.mxu0 0.0
        %369 = vmatpush.msra.mxu0 0.0
        %370 = vmatpush.msra.mxu0 0.0
        %371 = vmatpush.msra.mxu0 0.0
        %372 = vmatpush.msra.mxu0 0.0
        %373 = vmatpush.msra.mxu0 0.0
        %374 = vmatpush.msra.mxu0 0.0
        %375 = vmatpush.msra.mxu0 0.0
        %376 = vmatpush.msra.mxu0 0.0
        %377 = vmatpush.msra.mxu0 0.0
        %378 = vmatpush.msra.mxu0 %v196
        %379 = vmatpush.msra.mxu0 %v195
        %380 = vmatmul.f32.gmra.mxu0 %v362
        %v381 = vpop.f32.mrf.mxu0
        %v382 = vadd.f32 0.0, %v381
        %383 = vdwg.mxu0
        %385 = vrot.lane.b32.xlu0 %v382, 40
        %v386 = vpop.permute.xlu0 %385
        %vm388 = vcmask 388416
        %389 = vst.msk [vmem:[%s180] sm:$0xf] %vm388, %v386
        %v390 = vld [vmem:[%s193 + $0x4] sm:$0xf]
        %392 = vst [vmem:[#allocation1] ss:$2 sm:$0xff] %v390
        %v393 = vld.sshfl [vmem:[#allocation1] sm:$0xff pattern:$0x75316420]
        %394 = vrot.lane.b32.xlu0 %v393, 64
        %v395 = vpop.permute.xlu0 %394
        %v396 = vsel %vm198, %v395, 0
        %398 = vmatpush.msra.mxu0 0.0
        %399 = vmatpush.msra.mxu0 0.0
        %400 = vmatpush.msra.mxu0 0.0
        %401 = vmatpush.msra.mxu0 0.0
        %402 = vmatpush.msra.mxu0 0.0
        %403 = vmatpush.msra.mxu0 0.0
        %404 = vmatpush.msra.mxu0 0.0
        %405 = vmatpush.msra.mxu0 0.0
        %406 = vmatpush.msra.mxu0 0.0
        %407 = vmatpush.msra.mxu0 0.0
        %408 = vmatpush.msra.mxu0 0.0
        %409 = vmatpush.msra.mxu0 0.0
        %410 = vmatpush.msra.mxu0 0.0
        %411 = vmatpush.msra.mxu0 0.0
        %412 = vmatpush.msra.mxu0 %v196
        %413 = vmatpush.msra.mxu0 %v195
        %414 = vmatmul.f32.gmra.mxu0 %v396
        %v415 = vpop.f32.mrf.mxu0
        %v416 = vadd.f32 0.0, %v415
        %417 = vdwg.mxu0
        %419 = vrot.lane.b32.xlu0 %v416, 48
        %v420 = vpop.permute.xlu0 %419
        %vm422 = vcmask 454016
        %423 = vst.msk [vmem:[%s180] sm:$0xf] %vm422, %v420
        %v424 = vld [vmem:[%s193 + $0x4] sm:$0xf]
        %426 = vst [vmem:[#allocation1] ss:$2 sm:$0xff] %v424
        %v427 = vld.sshfl [vmem:[#allocation1] sm:$0xff pattern:$0x75316420]
        %428 = vrot.lane.b32.xlu0 %v427, 32
        %v429 = vpop.permute.xlu0 %428
        %v430 = vsel %vm198, %v429, 0
        %432 = vmatpush.msra.mxu0 0.0
        %433 = vmatpush.msra.mxu0 0.0
        %434 = vmatpush.msra.mxu0 0.0
        %435 = vmatpush.msra.mxu0 0.0
        %436 = vmatpush.msra.mxu0 0.0
        %437 = vmatpush.msra.mxu0 0.0
        %438 = vmatpush.msra.mxu0 0.0
        %439 = vmatpush.msra.mxu0 0.0
        %440 = vmatpush.msra.mxu0 0.0
        %441 = vmatpush.msra.mxu0 0.0
        %442 = vmatpush.msra.mxu0 0.0
        %443 = vmatpush.msra.mxu0 0.0
        %444 = vmatpush.msra.mxu0 0.0
        %445 = vmatpush.msra.mxu0 0.0
        %446 = vmatpush.msra.mxu0 %v196
        %447 = vmatpush.msra.mxu0 %v195
        %448 = vmatmul.f32.gmra.mxu0 %v430
        %v449 = vpop.f32.mrf.mxu0
        %v450 = vadd.f32 0.0, %v449
        %451 = vdwg.mxu0
        %453 = vrot.lane.b32.xlu0 %v450, 56
        %v454 = vpop.permute.xlu0 %453
        %vm456 = vcmask 519616
        %457 = vst.msk [vmem:[%s180] sm:$0xf] %vm456, %v454
        %v458 = vld [vmem:[%s193] sm:$0xf]
        %460 = vst [vmem:[#allocation1] ss:$2 sm:$0xff] %v458
        %v461 = vld.sshfl [vmem:[#allocation1] sm:$0xff pattern:$0x75316420]
        %462 = vrot.lane.b32.xlu0 %v461, 112
        %v463 = vpop.permute.xlu0 %462
        %v464 = vsel %vm198, %v463, 0
        %466 = vmatpush.msra.mxu0 0.0
        %467 = vmatpush.msra.mxu0 0.0
        %468 = vmatpush.msra.mxu0 0.0
        %469 = vmatpush.msra.mxu0 0.0
        %470 = vmatpush.msra.mxu0 0.0
        %471 = vmatpush.msra.mxu0 0.0
        %472 = vmatpush.msra.mxu0 0.0
        %473 = vmatpush.msra.mxu0 0.0
        %474 = vmatpush.msra.mxu0 0.0
        %475 = vmatpush.msra.mxu0 0.0
        %476 = vmatpush.msra.mxu0 0.0
        %477 = vmatpush.msra.mxu0 0.0
        %478 = vmatpush.msra.mxu0 0.0
        %479 = vmatpush.msra.mxu0 0.0
        %480 = vmatpush.msra.mxu0 %v196
        %481 = vmatpush.msra.mxu0 %v195
        %482 = vmatmul.f32.gmra.mxu0 %v464
        %v483 = vpop.f32.mrf.mxu0
        %v484 = vadd.f32 0.0, %v483
        %485 = vdwg.mxu0
        %s486 = scalar_lea.vmem %s180, 8 [#allocation2]
        %487 = vst.msk [vmem:[%s486] sm:$0xf] %vm222, %v484
        %v488 = vld [vmem:[%s193] sm:$0xf]
        %490 = vst [vmem:[#allocation1] ss:$2 sm:$0xff] %v488
        %v491 = vld.sshfl [vmem:[#allocation1] sm:$0xff pattern:$0x75316420]
        %492 = vrot.lane.b32.xlu0 %v491, 80
        %v493 = vpop.permute.xlu0 %492
        %v494 = vsel %vm198, %v493, 0
        %496 = vmatpush.msra.mxu0 0.0
        %497 = vmatpush.msra.mxu0 0.0
        %498 = vmatpush.msra.mxu0 0.0
        %499 = vmatpush.msra.mxu0 0.0
        %500 = vmatpush.msra.mxu0 0.0
        %501 = vmatpush.msra.mxu0 0.0
        %502 = vmatpush.msra.mxu0 0.0
        %503 = vmatpush.msra.mxu0 0.0
        %504 = vmatpush.msra.mxu0 0.0
        %505 = vmatpush.msra.mxu0 0.0
        %506 = vmatpush.msra.mxu0 0.0
        %507 = vmatpush.msra.mxu0 0.0
        %508 = vmatpush.msra.mxu0 0.0
        %509 = vmatpush.msra.mxu0 0.0
        %510 = vmatpush.msra.mxu0 %v196
        %511 = vmatpush.msra.mxu0 %v195
        %512 = vmatmul.f32.gmra.mxu0 %v494
        %v513 = vpop.f32.mrf.mxu0
        %v514 = vadd.f32 0.0, %v513
        %515 = vdwg.mxu0
        %517 = vrot.lane.b32.xlu0 %v514, 8
        %v518 = vpop.permute.xlu0 %517
        %520 = vst.msk [vmem:[%s486] sm:$0xf] %vm256, %v518
        %v521 = vld [vmem:[%s193] sm:$0xf]
        %523 = vst [vmem:[#allocation1] ss:$2 sm:$0xff] %v521
        %v524 = vld.sshfl [vmem:[#allocation1] sm:$0xff pattern:$0x75316420]
        %525 = vrot.lane.b32.xlu0 %v524, 48
        %v526 = vpop.permute.xlu0 %525
        %v527 = vsel %vm198, %v526, 0
        %529 = vmatpush.msra.mxu0 0.0
        %530 = vmatpush.msra.mxu0 0.0
        %531 = vmatpush.msra.mxu0 0.0
        %532 = vmatpush.msra.mxu0 0.0
        %533 = vmatpush.msra.mxu0 0.0
        %534 = vmatpush.msra.mxu0 0.0
        %535 = vmatpush.msra.mxu0 0.0
        %536 = vmatpush.msra.mxu0 0.0
        %537 = vmatpush.msra.mxu0 0.0
        %538 = vmatpush.msra.mxu0 0.0
        %539 = vmatpush.msra.mxu0 0.0
        %540 = vmatpush.msra.mxu0 0.0
        %541 = vmatpush.msra.mxu0 0.0
        %542 = vmatpush.msra.mxu0 0.0
        %543 = vmatpush.msra.mxu0 %v196
        %544 = vmatpush.msra.mxu0 %v195
        %545 = vmatmul.f32.gmra.mxu0 %v527
        %v546 = vpop.f32.mrf.mxu0
        %v547 = vadd.f32 0.0, %v546
        %548 = vdwg.mxu0
        %550 = vrot.lane.b32.xlu0 %v547, 16
        %v551 = vpop.permute.xlu0 %550
        %553 = vst.msk [vmem:[%s486] sm:$0xf] %vm290, %v551
        %v554 = vld [vmem:[%s193] sm:$0xf]
        %556 = vst [vmem:[#allocation1] ss:$2 sm:$0xff] %v554
        %v557 = vld.sshfl [vmem:[#allocation1] sm:$0xff pattern:$0x75316420]
        %558 = vrot.lane.b32.xlu0 %v557, 16
        %v559 = vpop.permute.xlu0 %558
        %v560 = vsel %vm198, %v559, 0
        %562 = vmatpush.msra.mxu0 0.0
        %563 = vmatpush.msra.mxu0 0.0
        %564 = vmatpush.msra.mxu0 0.0
        %565 = vmatpush.msra.mxu0 0.0
        %566 = vmatpush.msra.mxu0 0.0
        %567 = vmatpush.msra.mxu0 0.0
        %568 = vmatpush.msra.mxu0 0.0
        %569 = vmatpush.msra.mxu0 0.0
        %570 = vmatpush.msra.mxu0 0.0
        %571 = vmatpush.msra.mxu0 0.0
        %572 = vmatpush.msra.mxu0 0.0
        %573 = vmatpush.msra.mxu0 0.0
        %574 = vmatpush.msra.mxu0 0.0
        %575 = vmatpush.msra.mxu0 0.0
        %576 = vmatpush.msra.mxu0 %v196
        %577 = vmatpush.msra.mxu0 %v195
        %578 = vmatmul.f32.gmra.mxu0 %v560
        %v579 = vpop.f32.mrf.mxu0
        %v580 = vadd.f32 0.0, %v579
        %581 = vdwg.mxu0
        %583 = vrot.lane.b32.xlu0 %v580, 24
        %v584 = vpop.permute.xlu0 %583
        %586 = vst.msk [vmem:[%s486] sm:$0xf] %vm324, %v584
        %v587 = vld [vmem:[%s193 + $0x4] sm:$0xf]
        %589 = vst [vmem:[#allocation1] ss:$2 sm:$0xff] %v587
        %v590 = vld.sshfl [vmem:[#allocation1] sm:$0xff pattern:$0x75316420]
        %591 = vrot.lane.b32.xlu0 %v590, 112
        %v592 = vpop.permute.xlu0 %591
        %v593 = vsel %vm198, %v592, 0
        %595 = vmatpush.msra.mxu0 0.0
        %596 = vmatpush.msra.mxu0 0.0
        %597 = vmatpush.msra.mxu0 0.0
        %598 = vmatpush.msra.mxu0 0.0
        %599 = vmatpush.msra.mxu0 0.0
        %600 = vmatpush.msra.mxu0 0.0
        %601 = vmatpush.msra.mxu0 0.0
        %602 = vmatpush.msra.mxu0 0.0
        %603 = vmatpush.msra.mxu0 0.0
        %604 = vmatpush.msra.mxu0 0.0
        %605 = vmatpush.msra.mxu0 0.0
        %606 = vmatpush.msra.mxu0 0.0
        %607 = vmatpush.msra.mxu0 0.0
        %608 = vmatpush.msra.mxu0 0.0
        %609 = vmatpush.msra.mxu0 %v196
        %610 = vmatpush.msra.mxu0 %v195
        %611 = vmatmul.f32.gmra.mxu0 %v593
        %v612 = vpop.f32.mrf.mxu0
        %v613 = vadd.f32 0.0, %v612
        %614 = vdwg.mxu0
        %616 = vrot.lane.b32.xlu0 %v613, 32
        %v617 = vpop.permute.xlu0 %616
        %619 = vst.msk [vmem:[%s486] sm:$0xf] %vm354, %v617
        %v620 = vld [vmem:[%s193 + $0x4] sm:$0xf]
        %622 = vst [vmem:[#allocation1] ss:$2 sm:$0xff] %v620
        %v623 = vld.sshfl [vmem:[#allocation1] sm:$0xff pattern:$0x75316420]
        %624 = vrot.lane.b32.xlu0 %v623, 80
        %v625 = vpop.permute.xlu0 %624
        %v626 = vsel %vm198, %v625, 0
        %628 = vmatpush.msra.mxu0 0.0
        %629 = vmatpush.msra.mxu0 0.0
        %630 = vmatpush.msra.mxu0 0.0
        %631 = vmatpush.msra.mxu0 0.0
        %632 = vmatpush.msra.mxu0 0.0
        %633 = vmatpush.msra.mxu0 0.0
        %634 = vmatpush.msra.mxu0 0.0
        %635 = vmatpush.msra.mxu0 0.0
        %636 = vmatpush.msra.mxu0 0.0
        %637 = vmatpush.msra.mxu0 0.0
        %638 = vmatpush.msra.mxu0 0.0
        %639 = vmatpush.msra.mxu0 0.0
        %640 = vmatpush.msra.mxu0 0.0
        %641 = vmatpush.msra.mxu0 0.0
        %642 = vmatpush.msra.mxu0 %v196
        %643 = vmatpush.msra.mxu0 %v195
        %644 = vmatmul.f32.gmra.mxu0 %v626
        %v645 = vpop.f32.mrf.mxu0
        %v646 = vadd.f32 0.0, %v645
        %647 = vdwg.mxu0
        %649 = vrot.lane.b32.xlu0 %v646, 40
        %v650 = vpop.permute.xlu0 %649
        %652 = vst.msk [vmem:[%s486] sm:$0xf] %vm388, %v650
        %v653 = vld [vmem:[%s193 + $0x4] sm:$0xf]
        %655 = vst [vmem:[#allocation1] ss:$2 sm:$0xff] %v653
        %v656 = vld.sshfl [vmem:[#allocation1] sm:$0xff pattern:$0x75316420]
        %657 = vrot.lane.b32.xlu0 %v656, 48
        %v658 = vpop.permute.xlu0 %657
        %v659 = vsel %vm198, %v658, 0
        %661 = vmatpush.msra.mxu0 0.0
        %662 = vmatpush.msra.mxu0 0.0
        %663 = vmatpush.msra.mxu0 0.0
        %664 = vmatpush.msra.mxu0 0.0
        %665 = vmatpush.msra.mxu0 0.0
        %666 = vmatpush.msra.mxu0 0.0
        %667 = vmatpush.msra.mxu0 0.0
        %668 = vmatpush.msra.mxu0 0.0
        %669 = vmatpush.msra.mxu0 0.0
        %670 = vmatpush.msra.mxu0 0.0
        %671 = vmatpush.msra.mxu0 0.0
        %672 = vmatpush.msra.mxu0 0.0
        %673 = vmatpush.msra.mxu0 0.0
        %674 = vmatpush.msra.mxu0 0.0
        %675 = vmatpush.msra.mxu0 %v196
        %676 = vmatpush.msra.mxu0 %v195
        %677 = vmatmul.f32.gmra.mxu0 %v659
        %v678 = vpop.f32.mrf.mxu0
        %v679 = vadd.f32 0.0, %v678
        %680 = vdwg.mxu0
        %682 = vrot.lane.b32.xlu0 %v679, 48
        %v683 = vpop.permute.xlu0 %682
        %685 = vst.msk [vmem:[%s486] sm:$0xf] %vm422, %v683
        %v686 = vld [vmem:[%s193 + $0x4] sm:$0xf]
        %688 = vst [vmem:[#allocation1] ss:$2 sm:$0xff] %v686
        %v689 = vld.sshfl [vmem:[#allocation1] sm:$0xff pattern:$0x75316420]
        %690 = vrot.lane.b32.xlu0 %v689, 16
        %v691 = vpop.permute.xlu0 %690
        %v692 = vsel %vm198, %v691, 0
        %694 = vmatpush.msra.mxu0 0.0
        %695 = vmatpush.msra.mxu0 0.0
        %696 = vmatpush.msra.mxu0 0.0
        %697 = vmatpush.msra.mxu0 0.0
        %698 = vmatpush.msra.mxu0 0.0
        %699 = vmatpush.msra.mxu0 0.0
        %700 = vmatpush.msra.mxu0 0.0
        %701 = vmatpush.msra.mxu0 0.0
        %702 = vmatpush.msra.mxu0 0.0
        %703 = vmatpush.msra.mxu0 0.0
        %704 = vmatpush.msra.mxu0 0.0
        %705 = vmatpush.msra.mxu0 0.0
        %706 = vmatpush.msra.mxu0 0.0
        %707 = vmatpush.msra.mxu0 0.0
        %708 = vmatpush.msra.mxu0 %v196
        %709 = vmatpush.msra.mxu0 %v195
        %710 = vmatmul.f32.gmra.mxu0 %v692
        %v711 = vpop.f32.mrf.mxu0
        %v712 = vadd.f32 0.0, %v711
        %713 = vdwg.mxu0
        %715 = vrot.lane.b32.xlu0 %v712, 56
        %v716 = vpop.permute.xlu0 %715
        %718 = vst.msk [vmem:[%s486] sm:$0xf] %vm456, %v716
        %s719 = scalar_lea.vmem %s1, 16
        %v720 = vld [vmem:[%s719] sm:$0xff]
        %v721 = vld [vmem:[%s719 + $0x8] sm:$0xff]
        %v722 = vld [vmem:[%s193] sm:$0xf]
        %v724 = vsel %vm198, %v722, 0
        %726 = vmatpush.msra.mxu0 0.0
        %727 = vmatpush.msra.mxu0 0.0
        %728 = vmatpush.msra.mxu0 0.0
        %729 = vmatpush.msra.mxu0 0.0
        %730 = vmatpush.msra.mxu0 0.0
        %731 = vmatpush.msra.mxu0 0.0
        %732 = vmatpush.msra.mxu0 0.0
        %733 = vmatpush.msra.mxu0 0.0
        %734 = vmatpush.msra.mxu0 0.0
        %735 = vmatpush.msra.mxu0 0.0
        %736 = vmatpush.msra.mxu0 0.0
        %737 = vmatpush.msra.mxu0 0.0
        %738 = vmatpush.msra.mxu0 0.0
        %739 = vmatpush.msra.mxu0 0.0
        %740 = vmatpush.msra.mxu0 %v721
        %741 = vmatpush.msra.mxu0 %v720
        %742 = vmatmul.f32.gmra.mxu0 %v724
        %v743 = vpop.f32.mrf.mxu0
        %v744 = vadd.f32 0.0, %v743
        %745 = vdwg.mxu0
        %s746 = scalar_lea.vmem %s180, 4 [#allocation2]
        %747 = vst.msk [vmem:[%s746] sm:$0xf] %vm222, %v744
        %v748 = vld [vmem:[%s193] sm:$0xf]
        %750 = vst [vmem:[#allocation1] ss:$2 sm:$0xff] %v748
        %v751 = vld.sshfl [vmem:[#allocation1] sm:$0xff pattern:$0x75316420]
        %752 = vrot.lane.b32.xlu0 %v751, 96
        %v753 = vpop.permute.xlu0 %752
        %v754 = vsel %vm198, %v753, 0
        %756 = vmatpush.msra.mxu0 0.0
        %757 = vmatpush.msra.mxu0 0.0
        %758 = vmatpush.msra.mxu0 0.0
        %759 = vmatpush.msra.mxu0 0.0
        %760 = vmatpush.msra.mxu0 0.0
        %761 = vmatpush.msra.mxu0 0.0
        %762 = vmatpush.msra.mxu0 0.0
        %763 = vmatpush.msra.mxu0 0.0
        %764 = vmatpush.msra.mxu0 0.0
        %765 = vmatpush.msra.mxu0 0.0
        %766 = vmatpush.msra.mxu0 0.0
        %767 = vmatpush.msra.mxu0 0.0
        %768 = vmatpush.msra.mxu0 0.0
        %769 = vmatpush.msra.mxu0 0.0
        %770 = vmatpush.msra.mxu0 %v721
        %771 = vmatpush.msra.mxu0 %v720
        %772 = vmatmul.f32.gmra.mxu0 %v754
        %v773 = vpop.f32.mrf.mxu0
        %v774 = vadd.f32 0.0, %v773
        %775 = vdwg.mxu0
        %777 = vrot.lane.b32.xlu0 %v774, 8
        %v778 = vpop.permute.xlu0 %777
        %780 = vst.msk [vmem:[%s746] sm:$0xf] %vm256, %v778
        %v781 = vld [vmem:[%s193] sm:$0xf]
        %783 = vst [vmem:[#allocation1] ss:$2 sm:$0xff] %v781
        %v784 = vld.sshfl [vmem:[#allocation1] sm:$0xff pattern:$0x75316420]
        %785 = vrot.lane.b32.xlu0 %v784, 64
        %v786 = vpop.permute.xlu0 %785
        %v787 = vsel %vm198, %v786, 0
        %789 = vmatpush.msra.mxu0 0.0
        %790 = vmatpush.msra.mxu0 0.0
        %791 = vmatpush.msra.mxu0 0.0
        %792 = vmatpush.msra.mxu0 0.0
        %793 = vmatpush.msra.mxu0 0.0
        %794 = vmatpush.msra.mxu0 0.0
        %795 = vmatpush.msra.mxu0 0.0
        %796 = vmatpush.msra.mxu0 0.0
        %797 = vmatpush.msra.mxu0 0.0
        %798 = vmatpush.msra.mxu0 0.0
        %799 = vmatpush.msra.mxu0 0.0
        %800 = vmatpush.msra.mxu0 0.0
        %801 = vmatpush.msra.mxu0 0.0
        %802 = vmatpush.msra.mxu0 0.0
        %803 = vmatpush.msra.mxu0 %v721
        %804 = vmatpush.msra.mxu0 %v720
        %805 = vmatmul.f32.gmra.mxu0 %v787
        %v806 = vpop.f32.mrf.mxu0
        %v807 = vadd.f32 0.0, %v806
        %808 = vdwg.mxu0
        %810 = vrot.lane.b32.xlu0 %v807, 16
        %v811 = vpop.permute.xlu0 %810
        %813 = vst.msk [vmem:[%s746] sm:$0xf] %vm290, %v811
        %v814 = vld [vmem:[%s193] sm:$0xf]
        %816 = vst [vmem:[#allocation1] ss:$2 sm:$0xff] %v814
        %v817 = vld.sshfl [vmem:[#allocation1] sm:$0xff pattern:$0x75316420]
        %818 = vrot.lane.b32.xlu0 %v817, 32
        %v819 = vpop.permute.xlu0 %818
        %v820 = vsel %vm198, %v819, 0
        %822 = vmatpush.msra.mxu0 0.0
        %823 = vmatpush.msra.mxu0 0.0
        %824 = vmatpush.msra.mxu0 0.0
        %825 = vmatpush.msra.mxu0 0.0
        %826 = vmatpush.msra.mxu0 0.0
        %827 = vmatpush.msra.mxu0 0.0
        %828 = vmatpush.msra.mxu0 0.0
        %829 = vmatpush.msra.mxu0 0.0
        %830 = vmatpush.msra.mxu0 0.0
        %831 = vmatpush.msra.mxu0 0.0
        %832 = vmatpush.msra.mxu0 0.0
        %833 = vmatpush.msra.mxu0 0.0
        %834 = vmatpush.msra.mxu0 0.0
        %835 = vmatpush.msra.mxu0 0.0
        %836 = vmatpush.msra.mxu0 %v721
        %837 = vmatpush.msra.mxu0 %v720
        %838 = vmatmul.f32.gmra.mxu0 %v820
        %v839 = vpop.f32.mrf.mxu0
        %v840 = vadd.f32 0.0, %v839
        %841 = vdwg.mxu0
        %843 = vrot.lane.b32.xlu0 %v840, 24
        %v844 = vpop.permute.xlu0 %843
        %846 = vst.msk [vmem:[%s746] sm:$0xf] %vm324, %v844
        %v847 = vld [vmem:[%s193 + $0x4] sm:$0xf]
        %v849 = vsel %vm198, %v847, 0
        %851 = vmatpush.msra.mxu0 0.0
        %852 = vmatpush.msra.mxu0 0.0
        %853 = vmatpush.msra.mxu0 0.0
        %854 = vmatpush.msra.mxu0 0.0
        %855 = vmatpush.msra.mxu0 0.0
        %856 = vmatpush.msra.mxu0 0.0
        %857 = vmatpush.msra.mxu0 0.0
        %858 = vmatpush.msra.mxu0 0.0
        %859 = vmatpush.msra.mxu0 0.0
        %860 = vmatpush.msra.mxu0 0.0
        %861 = vmatpush.msra.mxu0 0.0
        %862 = vmatpush.msra.mxu0 0.0
        %863 = vmatpush.msra.mxu0 0.0
        %864 = vmatpush.msra.mxu0 0.0
        %865 = vmatpush.msra.mxu0 %v721
        %866 = vmatpush.msra.mxu0 %v720
        %867 = vmatmul.f32.gmra.mxu0 %v849
        %v868 = vpop.f32.mrf.mxu0
        %v869 = vadd.f32 0.0, %v868
        %870 = vdwg.mxu0
        %872 = vrot.lane.b32.xlu0 %v869, 32
        %v873 = vpop.permute.xlu0 %872
        %875 = vst.msk [vmem:[%s746] sm:$0xf] %vm354, %v873
        %v876 = vld [vmem:[%s193 + $0x4] sm:$0xf]
        %878 = vst [vmem:[#allocation1] ss:$2 sm:$0xff] %v876
        %v879 = vld.sshfl [vmem:[#allocation1] sm:$0xff pattern:$0x75316420]
        %880 = vrot.lane.b32.xlu0 %v879, 96
        %v881 = vpop.permute.xlu0 %880
        %v882 = vsel %vm198, %v881, 0
        %884 = vmatpush.msra.mxu0 0.0
        %885 = vmatpush.msra.mxu0 0.0
        %886 = vmatpush.msra.mxu0 0.0
        %887 = vmatpush.msra.mxu0 0.0
        %888 = vmatpush.msra.mxu0 0.0
        %889 = vmatpush.msra.mxu0 0.0
        %890 = vmatpush.msra.mxu0 0.0
        %891 = vmatpush.msra.mxu0 0.0
        %892 = vmatpush.msra.mxu0 0.0
        %893 = vmatpush.msra.mxu0 0.0
        %894 = vmatpush.msra.mxu0 0.0
        %895 = vmatpush.msra.mxu0 0.0
        %896 = vmatpush.msra.mxu0 0.0
        %897 = vmatpush.msra.mxu0 0.0
        %898 = vmatpush.msra.mxu0 %v721
        %899 = vmatpush.msra.mxu0 %v720
        %900 = vmatmul.f32.gmra.mxu0 %v882
        %v901 = vpop.f32.mrf.mxu0
        %v902 = vadd.f32 0.0, %v901
        %903 = vdwg.mxu0
        %905 = vrot.lane.b32.xlu0 %v902, 40
        %v906 = vpop.permute.xlu0 %905
        %908 = vst.msk [vmem:[%s746] sm:$0xf] %vm388, %v906
        %v909 = vld [vmem:[%s193 + $0x4] sm:$0xf]
        %911 = vst [vmem:[#allocation1] ss:$2 sm:$0xff] %v909
        %v912 = vld.sshfl [vmem:[#allocation1] sm:$0xff pattern:$0x75316420]
        %913 = vrot.lane.b32.xlu0 %v912, 64
        %v914 = vpop.permute.xlu0 %913
        %v915 = vsel %vm198, %v914, 0
        %917 = vmatpush.msra.mxu0 0.0
        %918 = vmatpush.msra.mxu0 0.0
        %919 = vmatpush.msra.mxu0 0.0
        %920 = vmatpush.msra.mxu0 0.0
        %921 = vmatpush.msra.mxu0 0.0
        %922 = vmatpush.msra.mxu0 0.0
        %923 = vmatpush.msra.mxu0 0.0
        %924 = vmatpush.msra.mxu0 0.0
        %925 = vmatpush.msra.mxu0 0.0
        %926 = vmatpush.msra.mxu0 0.0
        %927 = vmatpush.msra.mxu0 0.0
        %928 = vmatpush.msra.mxu0 0.0
        %929 = vmatpush.msra.mxu0 0.0
        %930 = vmatpush.msra.mxu0 0.0
        %931 = vmatpush.msra.mxu0 %v721
        %932 = vmatpush.msra.mxu0 %v720
        %933 = vmatmul.f32.gmra.mxu0 %v915
        %v934 = vpop.f32.mrf.mxu0
        %v935 = vadd.f32 0.0, %v934
        %936 = vdwg.mxu0
        %938 = vrot.lane.b32.xlu0 %v935, 48
        %v939 = vpop.permute.xlu0 %938
        %941 = vst.msk [vmem:[%s746] sm:$0xf] %vm422, %v939
        %v942 = vld [vmem:[%s193 + $0x4] sm:$0xf]
        %944 = vst [vmem:[#allocation1] ss:$2 sm:$0xff] %v942
        %v945 = vld.sshfl [vmem:[#allocation1] sm:$0xff pattern:$0x75316420]
        %946 = vrot.lane.b32.xlu0 %v945, 32
        %v947 = vpop.permute.xlu0 %946
        %v948 = vsel %vm198, %v947, 0
        %950 = vmatpush.msra.mxu0 0.0
        %951 = vmatpush.msra.mxu0 0.0
        %952 = vmatpush.msra.mxu0 0.0
        %953 = vmatpush.msra.mxu0 0.0
        %954 = vmatpush.msra.mxu0 0.0
        %955 = vmatpush.msra.mxu0 0.0
        %956 = vmatpush.msra.mxu0 0.0
        %957 = vmatpush.msra.mxu0 0.0
        %958 = vmatpush.msra.mxu0 0.0
        %959 = vmatpush.msra.mxu0 0.0
        %960 = vmatpush.msra.mxu0 0.0
        %961 = vmatpush.msra.mxu0 0.0
        %962 = vmatpush.msra.mxu0 0.0
        %963 = vmatpush.msra.mxu0 0.0
        %964 = vmatpush.msra.mxu0 %v721
        %965 = vmatpush.msra.mxu0 %v720
        %966 = vmatmul.f32.gmra.mxu0 %v948
        %v967 = vpop.f32.mrf.mxu0
        %v968 = vadd.f32 0.0, %v967
        %969 = vdwg.mxu0
        %971 = vrot.lane.b32.xlu0 %v968, 56
        %v972 = vpop.permute.xlu0 %971
        %974 = vst.msk [vmem:[%s746] sm:$0xf] %vm456, %v972
        %v975 = vld [vmem:[%s193] sm:$0xf]
        %977 = vst [vmem:[#allocation1] ss:$2 sm:$0xff] %v975
        %v978 = vld.sshfl [vmem:[#allocation1] sm:$0xff pattern:$0x75316420]
        %979 = vrot.lane.b32.xlu0 %v978, 112
        %v980 = vpop.permute.xlu0 %979
        %v981 = vsel %vm198, %v980, 0
        %983 = vmatpush.msra.mxu0 0.0
        %984 = vmatpush.msra.mxu0 0.0
        %985 = vmatpush.msra.mxu0 0.0
        %986 = vmatpush.msra.mxu0 0.0
        %987 = vmatpush.msra.mxu0 0.0
        %988 = vmatpush.msra.mxu0 0.0
        %989 = vmatpush.msra.mxu0 0.0
        %990 = vmatpush.msra.mxu0 0.0
        %991 = vmatpush.msra.mxu0 0.0
        %992 = vmatpush.msra.mxu0 0.0
        %993 = vmatpush.msra.mxu0 0.0
        %994 = vmatpush.msra.mxu0 0.0
        %995 = vmatpush.msra.mxu0 0.0
        %996 = vmatpush.msra.mxu0 0.0
        %997 = vmatpush.msra.mxu0 %v721
        %998 = vmatpush.msra.mxu0 %v720
        %999 = vmatmul.f32.gmra.mxu0 %v981
        %v1000 = vpop.f32.mrf.mxu0
        %v1001 = vadd.f32 0.0, %v1000
        %1002 = vdwg.mxu0
        %s1003 = scalar_lea.vmem %s180, 12 [#allocation2]
        %1004 = vst.msk [vmem:[%s1003] sm:$0xf] %vm222, %v1001
        %v1005 = vld [vmem:[%s193] sm:$0xf]
        %1007 = vst [vmem:[#allocation1] ss:$2 sm:$0xff] %v1005
        %v1008 = vld.sshfl [vmem:[#allocation1] sm:$0xff pattern:$0x75316420]
        %1009 = vrot.lane.b32.xlu0 %v1008, 80
        %v1010 = vpop.permute.xlu0 %1009
        %v1011 = vsel %vm198, %v1010, 0
        %1013 = vmatpush.msra.mxu0 0.0
        %1014 = vmatpush.msra.mxu0 0.0
        %1015 = vmatpush.msra.mxu0 0.0
        %1016 = vmatpush.msra.mxu0 0.0
        %1017 = vmatpush.msra.mxu0 0.0
        %1018 = vmatpush.msra.mxu0 0.0
        %1019 = vmatpush.msra.mxu0 0.0
        %1020 = vmatpush.msra.mxu0 0.0
        %1021 = vmatpush.msra.mxu0 0.0
        %1022 = vmatpush.msra.mxu0 0.0
        %1023 = vmatpush.msra.mxu0 0.0
        %1024 = vmatpush.msra.mxu0 0.0
        %1025 = vmatpush.msra.mxu0 0.0
        %1026 = vmatpush.msra.mxu0 0.0
        %1027 = vmatpush.msra.mxu0 %v721
        %1028 = vmatpush.msra.mxu0 %v720
        %1029 = vmatmul.f32.gmra.mxu0 %v1011
        %v1030 = vpop.f32.mrf.mxu0
        %v1031 = vadd.f32 0.0, %v1030
        %1032 = vdwg.mxu0
        %1034 = vrot.lane.b32.xlu0 %v1031, 8
        %v1035 = vpop.permute.xlu0 %1034
        %1037 = vst.msk [vmem:[%s1003] sm:$0xf] %vm256, %v1035
        %v1038 = vld [vmem:[%s193] sm:$0xf]
        %1040 = vst [vmem:[#allocation1] ss:$2 sm:$0xff] %v1038
        %v1041 = vld.sshfl [vmem:[#allocation1] sm:$0xff pattern:$0x75316420]
        %1042 = vrot.lane.b32.xlu0 %v1041, 48
        %v1043 = vpop.permute.xlu0 %1042
        %v1044 = vsel %vm198, %v1043, 0
        %1046 = vmatpush.msra.mxu0 0.0
        %1047 = vmatpush.msra.mxu0 0.0
        %1048 = vmatpush.msra.mxu0 0.0
        %1049 = vmatpush.msra.mxu0 0.0
        %1050 = vmatpush.msra.mxu0 0.0
        %1051 = vmatpush.msra.mxu0 0.0
        %1052 = vmatpush.msra.mxu0 0.0
        %1053 = vmatpush.msra.mxu0 0.0
        %1054 = vmatpush.msra.mxu0 0.0
        %1055 = vmatpush.msra.mxu0 0.0
        %1056 = vmatpush.msra.mxu0 0.0
        %1057 = vmatpush.msra.mxu0 0.0
        %1058 = vmatpush.msra.mxu0 0.0
        %1059 = vmatpush.msra.mxu0 0.0
        %1060 = vmatpush.msra.mxu0 %v721
        %1061 = vmatpush.msra.mxu0 %v720
        %1062 = vmatmul.f32.gmra.mxu0 %v1044
        %v1063 = vpop.f32.mrf.mxu0
        %v1064 = vadd.f32 0.0, %v1063
        %1065 = vdwg.mxu0
        %1067 = vrot.lane.b32.xlu0 %v1064, 16
        %v1068 = vpop.permute.xlu0 %1067
        %1070 = vst.msk [vmem:[%s1003] sm:$0xf] %vm290, %v1068
        %v1071 = vld [vmem:[%s193] sm:$0xf]
        %1073 = vst [vmem:[#allocation1] ss:$2 sm:$0xff] %v1071
        %v1074 = vld.sshfl [vmem:[#allocation1] sm:$0xff pattern:$0x75316420]
        %1075 = vrot.lane.b32.xlu0 %v1074, 16
        %v1076 = vpop.permute.xlu0 %1075
        %v1077 = vsel %vm198, %v1076, 0
        %1079 = vmatpush.msra.mxu0 0.0
        %1080 = vmatpush.msra.mxu0 0.0
        %1081 = vmatpush.msra.mxu0 0.0
        %1082 = vmatpush.msra.mxu0 0.0
        %1083 = vmatpush.msra.mxu0 0.0
        %1084 = vmatpush.msra.mxu0 0.0
        %1085 = vmatpush.msra.mxu0 0.0
        %1086 = vmatpush.msra.mxu0 0.0
        %1087 = vmatpush.msra.mxu0 0.0
        %1088 = vmatpush.msra.mxu0 0.0
        %1089 = vmatpush.msra.mxu0 0.0
        %1090 = vmatpush.msra.mxu0 0.0
        %1091 = vmatpush.msra.mxu0 0.0
        %1092 = vmatpush.msra.mxu0 0.0
        %1093 = vmatpush.msra.mxu0 %v721
        %1094 = vmatpush.msra.mxu0 %v720
        %1095 = vmatmul.f32.gmra.mxu0 %v1077
        %v1096 = vpop.f32.mrf.mxu0
        %v1097 = vadd.f32 0.0, %v1096
        %1098 = vdwg.mxu0
        %1100 = vrot.lane.b32.xlu0 %v1097, 24
        %v1101 = vpop.permute.xlu0 %1100
        %1103 = vst.msk [vmem:[%s1003] sm:$0xf] %vm324, %v1101
        %v1104 = vld [vmem:[%s193 + $0x4] sm:$0xf]
        %1106 = vst [vmem:[#allocation1] ss:$2 sm:$0xff] %v1104
        %v1107 = vld.sshfl [vmem:[#allocation1] sm:$0xff pattern:$0x75316420]
        %1108 = vrot.lane.b32.xlu0 %v1107, 112
        %v1109 = vpop.permute.xlu0 %1108
        %v1110 = vsel %vm198, %v1109, 0
        %1112 = vmatpush.msra.mxu0 0.0
        %1113 = vmatpush.msra.mxu0 0.0
        %1114 = vmatpush.msra.mxu0 0.0
        %1115 = vmatpush.msra.mxu0 0.0
        %1116 = vmatpush.msra.mxu0 0.0
        %1117 = vmatpush.msra.mxu0 0.0
        %1118 = vmatpush.msra.mxu0 0.0
        %1119 = vmatpush.msra.mxu0 0.0
        %1120 = vmatpush.msra.mxu0 0.0
        %1121 = vmatpush.msra.mxu0 0.0
        %1122 = vmatpush.msra.mxu0 0.0
        %1123 = vmatpush.msra.mxu0 0.0
        %1124 = vmatpush.msra.mxu0 0.0
        %1125 = vmatpush.msra.mxu0 0.0
        %1126 = vmatpush.msra.mxu0 %v721
        %1127 = vmatpush.msra.mxu0 %v720
        %1128 = vmatmul.f32.gmra.mxu0 %v1110
        %v1129 = vpop.f32.mrf.mxu0
        %v1130 = vadd.f32 0.0, %v1129
        %1131 = vdwg.mxu0
        %1133 = vrot.lane.b32.xlu0 %v1130, 32
        %v1134 = vpop.permute.xlu0 %1133
        %1136 = vst.msk [vmem:[%s1003] sm:$0xf] %vm354, %v1134
        %v1137 = vld [vmem:[%s193 + $0x4] sm:$0xf]
        %1139 = vst [vmem:[#allocation1] ss:$2 sm:$0xff] %v1137
        %v1140 = vld.sshfl [vmem:[#allocation1] sm:$0xff pattern:$0x75316420]
        %1141 = vrot.lane.b32.xlu0 %v1140, 80
        %v1142 = vpop.permute.xlu0 %1141
        %v1143 = vsel %vm198, %v1142, 0
        %1145 = vmatpush.msra.mxu0 0.0
        %1146 = vmatpush.msra.mxu0 0.0
        %1147 = vmatpush.msra.mxu0 0.0
        %1148 = vmatpush.msra.mxu0 0.0
        %1149 = vmatpush.msra.mxu0 0.0
        %1150 = vmatpush.msra.mxu0 0.0
        %1151 = vmatpush.msra.mxu0 0.0
        %1152 = vmatpush.msra.mxu0 0.0
        %1153 = vmatpush.msra.mxu0 0.0
        %1154 = vmatpush.msra.mxu0 0.0
        %1155 = vmatpush.msra.mxu0 0.0
        %1156 = vmatpush.msra.mxu0 0.0
        %1157 = vmatpush.msra.mxu0 0.0
        %1158 = vmatpush.msra.mxu0 0.0
        %1159 = vmatpush.msra.mxu0 %v721
        %1160 = vmatpush.msra.mxu0 %v720
        %1161 = vmatmul.f32.gmra.mxu0 %v1143
        %v1162 = vpop.f32.mrf.mxu0
        %v1163 = vadd.f32 0.0, %v1162
        %1164 = vdwg.mxu0
        %1166 = vrot.lane.b32.xlu0 %v1163, 40
        %v1167 = vpop.permute.xlu0 %1166
        %1169 = vst.msk [vmem:[%s1003] sm:$0xf] %vm388, %v1167
        %v1170 = vld [vmem:[%s193 + $0x4] sm:$0xf]
        %1172 = vst [vmem:[#allocation1] ss:$2 sm:$0xff] %v1170
        %v1173 = vld.sshfl [vmem:[#allocation1] sm:$0xff pattern:$0x75316420]
        %1174 = vrot.lane.b32.xlu0 %v1173, 48
        %v1175 = vpop.permute.xlu0 %1174
        %v1176 = vsel %vm198, %v1175, 0
        %1178 = vmatpush.msra.mxu0 0.0
        %1179 = vmatpush.msra.mxu0 0.0
        %1180 = vmatpush.msra.mxu0 0.0
        %1181 = vmatpush.msra.mxu0 0.0
        %1182 = vmatpush.msra.mxu0 0.0
        %1183 = vmatpush.msra.mxu0 0.0
        %1184 = vmatpush.msra.mxu0 0.0
        %1185 = vmatpush.msra.mxu0 0.0
        %1186 = vmatpush.msra.mxu0 0.0
        %1187 = vmatpush.msra.mxu0 0.0
        %1188 = vmatpush.msra.mxu0 0.0
        %1189 = vmatpush.msra.mxu0 0.0
        %1190 = vmatpush.msra.mxu0 0.0
        %1191 = vmatpush.msra.mxu0 0.0
        %1192 = vmatpush.msra.mxu0 %v721
        %1193 = vmatpush.msra.mxu0 %v720
        %1194 = vmatmul.f32.gmra.mxu0 %v1176
        %v1195 = vpop.f32.mrf.mxu0
        %v1196 = vadd.f32 0.0, %v1195
        %1197 = vdwg.mxu0
        %1199 = vrot.lane.b32.xlu0 %v1196, 48
        %v1200 = vpop.permute.xlu0 %1199
        %1202 = vst.msk [vmem:[%s1003] sm:$0xf] %vm422, %v1200
        %v1203 = vld [vmem:[%s193 + $0x4] sm:$0xf]
        %1205 = vst [vmem:[#allocation1] ss:$2 sm:$0xff] %v1203
        %v1206 = vld.sshfl [vmem:[#allocation1] sm:$0xff pattern:$0x75316420]
        %1207 = vrot.lane.b32.xlu0 %v1206, 16
        %v1208 = vpop.permute.xlu0 %1207
        %v1209 = vsel %vm198, %v1208, 0
        %1211 = vmatpush.msra.mxu0 0.0
        %1212 = vmatpush.msra.mxu0 0.0
        %1213 = vmatpush.msra.mxu0 0.0
        %1214 = vmatpush.msra.mxu0 0.0
        %1215 = vmatpush.msra.mxu0 0.0
        %1216 = vmatpush.msra.mxu0 0.0
        %1217 = vmatpush.msra.mxu0 0.0
        %1218 = vmatpush.msra.mxu0 0.0
        %1219 = vmatpush.msra.mxu0 0.0
        %1220 = vmatpush.msra.mxu0 0.0
        %1221 = vmatpush.msra.mxu0 0.0
        %1222 = vmatpush.msra.mxu0 0.0
        %1223 = vmatpush.msra.mxu0 0.0
        %1224 = vmatpush.msra.mxu0 0.0
        %1225 = vmatpush.msra.mxu0 %v721
        %1226 = vmatpush.msra.mxu0 %v720
        %1227 = vmatmul.f32.gmra.mxu0 %v1209
        %v1228 = vpop.f32.mrf.mxu0
        %v1229 = vadd.f32 0.0, %v1228
        %1230 = vdwg.mxu0
        %1232 = vrot.lane.b32.xlu0 %v1229, 56
        %v1233 = vpop.permute.xlu0 %1232
        %1235 = vst.msk [vmem:[%s1003] sm:$0xf] %vm456, %v1233
        %s1236 = sand.u32 %s98, 1
        %s1237 = scalar_lea.sflag [#allocation3], %s1236
        %s1238 = sand.u32 %s98, 1
        %s1239 = smul.addr %s1238, 16
        %s1240 = scalar_lea.vmem [#allocation2], %s1239
        // Predicated region
        $region29: #{tpu_custom_call.1} parent=27 // pred_check
          %p1241 = pneg %p108
        $region30: #{tpu_custom_call.1} parent=27 // pred_check_branch
          %1243 = sbr.rel (%p1241) target = $region32
        $region31: #{tpu_custom_call.1} parent=27 // pred_region
          %1245 = vsyncadd %s1237, 0
          %s1246 = sadd.s32 %s23, %s22
          %s1247 = smul.addr %s21, 4
          %s1248 = sadd.s32 %s1246, %s1247
          %s1249 = smul.addr %s1248, 4
          %s1250 = scalar_lea.hbm %s2, %s1249
          %s1251 = sshll.u32 %s1240, 4
          %s1252 = int_to_ptr.vmem [resolvable:$true] %s1251
          %s1253 = sshll.u32 %s1250, 4
          %s1254 = int_to_ptr.hbm [resolvable:$true] %s1253
          %1259 = dma.vmem_to_hbm [thread:$0]  %s1252, 256, %s1254, %s1237, 64, 64, 4
        $region32: #{tpu_custom_call.1} parent=27 // pred_fallthru
          _
      $region28: #{tpu_custom_call.1} parent=5 // pred_fallthru
        _
      %p1260 = scmp.le.s32.totalorder 2, %s11
      // Predicated region
      $region33: #{tpu_custom_call.1} parent=5 // pred_check
        %p1261 = pneg %p1260
      $region34: #{tpu_custom_call.1} parent=5 // pred_check_branch
        %1263 = sbr.rel (%p1261) target = $region36
      $region35: #{tpu_custom_call.1} parent=5 // pred_region
        %s1264 = ssub.s32 %s11, 2
        // Predicated region
        $region37: #{tpu_custom_call.1} parent=35 // pred_check
          %p1265 = pneg %p114
        $region38: #{tpu_custom_call.1} parent=35 // pred_check_branch
          %1267 = sbr.rel (%p1265) target = $region40
        $region39: #{tpu_custom_call.1} parent=35 // pred_region
          %s1268 = sand.u32 %s99, 1
          %s1269 = scalar_lea.sflag [#allocation3], %s1268
          %s1270 = sand.u32 %s99, 1
          %s1271 = smul.addr %s1270, 16
          %s1272 = scalar_lea.vmem [#allocation2], %s1271
          %1274 = dma.done %s1269, 256
        $region40: #{tpu_custom_call.1} parent=35 // pred_fallthru
          _
      $region36: #{tpu_custom_call.1} parent=5 // pred_fallthru
        _
    $region6: #{tpu_custom_call.1} parent=1 // loop_footer
      %s15 = sadd.s32 1, %s11
    $region7: #{tpu_custom_call.1} parent=1 // loop_footer_branch
      %10 = sbr.rel target = $region3
    $region8: #{tpu_custom_call.1} parent=1 // loop_exit
      _
    %1275 = vsyncpa [#allocation3], 1
    %s1276 = scalar_lea.sflag [#allocation3], 1
    %1277 = vsyncpa %s1276, 1

</llo_original>
